<compile_context>
chip_gen: v7x
topology: tpu7x:2x2x1
jax: 0.10.0
libtpu: 0.0.40
codegen_flags: <defaults>
</compile_context>

<pallas_src>
import functools

import numpy as np
import jax
import jax.numpy as jnp
from jax.experimental import pallas as pl
from jax.experimental.pallas import tpu as pltpu

OUT_PAD = 128  # lane-dense padded width of the final readout outputs


# ----------------------------------------------------------------------------
# Fused kernel: L x GNN_EBM_Layer_01  +  node_readout  +  edge_readout
# (runs once per batch element b = pl.program_id(0) via the grid)
# ----------------------------------------------------------------------------
def _fused_gnn_ebm_kernel(num_layers, d,
                          xn_ref, xe_ref, A_ref, Gcat_ref,
                          Wnode_ref, bn_ref, PWij_ref, bm_ref, We_ref, be_ref,
                          Wr1_ref, br1_ref, Wr2_ref, br2_ref, Wr3_ref, br3_ref,
                          Ue1_ref, ce1_ref, Ue2_ref, ce2_ref, Ue3_ref, ce3_ref,
                          hn_ref, he_ref):
    f32, bf16 = jnp.float32, jnp.bfloat16
    dot = lambda a, b: jnp.dot(a, b, preferred_element_type=f32)

    xn = xn_ref[0]          # (T, 2d)  bf16, lanes [neg | pos]
    xe = xe_ref[0]          # (M, 4d)  bf16, lanes k = 0..3
    A = A_ref[...]          # (T, M)   scatter-add by both endpoints (0/1/2)
    Gcat = Gcat_ref[...]    # (M, 2T)  [one_hot(edge0) | one_hot(edge1)]

    for l in range(num_layers):            # static unroll: L is small and known
        # ---- node path: ([A@xe | xn]) @ [0.5*kron(P_agg,Wn); kron(I2,Wn)] + bn
        u = dot(A, xe).astype(bf16)                                   # (T, 4d)
        xcat = jnp.concatenate([u, xn], axis=1)                       # (T, 6d)
        xn_new = dot(xcat, Wnode_ref[l]) + bn_ref[l]                  # (T, 2d) f32

        # ---- edge path (uses the layer-INPUT node features xn), weight-first
        ywide = dot(xn, PWij_ref[l]).astype(bf16)                     # (T, 8d)
        ycat = jnp.concatenate([ywide[:, :4 * d], ywide[:, 4 * d:]],
                               axis=0)                                # (2T, 4d)
        mlp = dot(Gcat, ycat) + bm_ref[l]                             # (M, 4d) f32
        xe_mid = (xe.astype(f32) + mlp).astype(bf16)
        xe = (dot(xe_mid, We_ref[l]) + be_ref[l]).astype(bf16)        # edge_layer

        # outer-model ReLU on node features only, skipped after the last layer
        if l < num_layers - 1:
            xn_new = jnp.maximum(xn_new, 0.0)                         # f32 VPU
        xn = xn_new.astype(bf16)
        # TODO(synk): F.dropout omitted (module default dropout=0 -> identity)

    # ---- node_readout: Linear(2d,2d) -> ReLU -> Linear(2d,d) -> ReLU -> Linear(d,128pad)
    h = jnp.maximum(dot(xn, Wr1_ref[...]) + br1_ref[...], 0.0).astype(bf16)
    h = jnp.maximum(dot(h, Wr2_ref[...]) + br2_ref[...], 0.0).astype(bf16)
    hn_ref[0] = dot(h, Wr3_ref[...]) + br3_ref[...]                   # (T, 128)

    # ---- edge_readout: Linear(4d,2d) -> ReLU -> Linear(2d,d) -> ReLU -> Linear(d,128pad)
    g = jnp.maximum(dot(xe, Ue1_ref[...]) + ce1_ref[...], 0.0).astype(bf16)
    g = jnp.maximum(dot(g, Ue2_ref[...]) + ce2_ref[...], 0.0).astype(bf16)
    he_ref[0] = dot(g, Ue3_ref[...]) + ce3_ref[...]                   # (M, 128)


# ----------------------------------------------------------------------------
# One-time packing of weights + graph structure (hoisted out of the forward)
# ----------------------------------------------------------------------------
def pack_model(params, edge, T):
    layers, node_ro, edge_ro = params
    f32, bf16 = jnp.float32, jnp.bfloat16
    S, K = 2, 4
    M = edge.shape[1]

    # per-batch structure matrices (shared by every grid step)
    Gi1 = jax.nn.one_hot(edge[0], T, dtype=f32)        # (M, T) one-hot of edge[0]
    Gj1 = jax.nn.one_hot(edge[1], T, dtype=f32)        # (M, T) one-hot of edge[1]
    A = (Gi1 + Gj1).T                                  # (T, M) scatter by both endpoints
    Gcat = jnp.concatenate([Gi1, Gj1], axis=1)         # (M, 2T) fused gather matrix

    i_idx = np.array([0, 0, 1, 1])                     # node_i_indice
    j_idx = np.array([0, 1, 0, 1])                     # node_j_indice
    agg_idx = np.array([0, 0, 1, 1])                   # aggregate_indice
    P_agg = np.zeros((K, S), np.float32); P_agg[np.arange(K), agg_idx] = 1.0
    P_i = np.zeros((S, K), np.float32); P_i[i_idx, np.arange(K)] = 1.0
    P_j = np.zeros((S, K), np.float32); P_j[j_idx, np.arange(K)] = 1.0
    eyeS = np.eye(S, dtype=np.float32)
    eyeK = np.eye(K, dtype=np.float32)

    Wnode_l, bn_l, PWij_l, bm_l, We_l, be_l = [], [], [], [], [], []
    for (Wn, bn, Wm, bm, We, be) in layers:
        # node: [A@xe | xn] layout -> rows [0.5*kron(P_agg,Wn) ; kron(I2,Wn)]
        Wnode_l.append(jnp.concatenate(
            [0.5 * jnp.kron(jnp.asarray(P_agg), Wn),   # (4d, 2d), 0.5 folded in
             jnp.kron(jnp.asarray(eyeS), Wn)], axis=0))            # -> (6d, 2d)
        bn_l.append(jnp.tile(bn, (1, S)))                          # (1, 2d)
        # edge mlp, weight-first: [PiWm | PjWm]
        PWij_l.append(jnp.concatenate(
            [jnp.kron(jnp.asarray(P_i), Wm),
             jnp.kron(jnp.asarray(P_j), Wm)], axis=1))             # (2d, 8d)
        bm_l.append(jnp.tile(bm, (1, K)))                          # (1, 4d)
        We_l.append(jnp.kron(jnp.asarray(eyeK), We))               # (4d, 4d)
        be_l.append(jnp.tile(be, (1, K)))                          # (1, 4d)

    stk_w = lambda xs: jnp.stack(xs, axis=0).astype(bf16)          # matmul operands
    stk_b = lambda xs: jnp.stack(xs, axis=0).astype(f32)           # biases stay f32

    Wr1, br1, Wr2, br2, Wr3, br3 = node_ro
    Ue1, ce1, Ue2, ce2, Ue3, ce3 = edge_ro
    pad_w = lambda W: jnp.pad(W, ((0, 0), (0, OUT_PAD - W.shape[1])))
    pad_b = lambda b: jnp.pad(b, ((0, 0), (0, OUT_PAD - b.shape[1])))

    return (A.astype(bf16), Gcat.astype(bf16),
            stk_w(Wnode_l), stk_b(bn_l), stk_w(PWij_l), stk_b(bm_l),
            stk_w(We_l), stk_b(be_l),
            Wr1.astype(bf16), br1.astype(f32), Wr2.astype(bf16), br2.astype(f32),
            pad_w(Wr3).astype(bf16), pad_b(br3).astype(f32),
            Ue1.astype(bf16), ce1.astype(f32), Ue2.astype(bf16), ce2.astype(f32),
            pad_w(Ue3).astype(bf16), pad_b(ce3).astype(f32))


# ----------------------------------------------------------------------------
# Jitted forward: reshape/cast activations + one pallas_call
# ----------------------------------------------------------------------------
@jax.jit
def gnn_energy_model_forward(packed, x_1st, x_2nd):
    """x_1st: (B,T,2,d), x_2nd: (B,M,4,d) -> ((B,T,2), (B,M,4))."""
    (A, Gcat, Wnode, bn, PWij, bm, We, be,
     Wr1, br1, Wr2, br2, Wr3, br3,
     Ue1, ce1, Ue2, ce2, Ue3, ce3) = packed
    B, T, S, d = x_1st.shape
    M, K = x_2nd.shape[1], x_2nd.shape[2]
    L = Wnode.shape[0]
    f32, bf16 = jnp.float32, jnp.bfloat16

    # lane-packed activations: free reshapes of the (B,T,2,d)/(B,M,4,d) layout
    xn0 = x_1st.reshape(B, T, S * d).astype(bf16)
    xe0 = x_2nd.reshape(B, M, K * d).astype(bf16)

    operands = (xn0, xe0, A, Gcat, Wnode, bn, PWij, bm, We, be,
                Wr1, br1, Wr2, br2, Wr3, br3, Ue1, ce1, Ue2, ce2, Ue3, ce3)

    batch3 = lambda b: (b, 0, 0)
    share2 = lambda b: (0, 0)
    share3 = lambda b: (0, 0, 0)
    full_spec = lambda a: pl.BlockSpec(a.shape, share2 if a.ndim == 2 else share3)
    in_specs = ([pl.BlockSpec((1, T, S * d), batch3),
                 pl.BlockSpec((1, M, K * d), batch3)]
                + [full_spec(a) for a in operands[2:]])
    out_specs = (pl.BlockSpec((1, T, OUT_PAD), batch3),
                 pl.BlockSpec((1, M, OUT_PAD), batch3))
    out_shape = (jax.ShapeDtypeStruct((B, T, OUT_PAD), f32),
                 jax.ShapeDtypeStruct((B, M, OUT_PAD), f32))

    # VMEM budget from the actual resident footprint: shared weights/structure
    # (single copy) + double-buffered per-batch activation/output blocks.
    resident = sum(int(np.prod(a.shape)) * a.dtype.itemsize for a in operands[2:])
    per_step = ((T * S * d + M * K * d) * 2          # bf16 activation blocks
                + (T + M) * OUT_PAD * 4)             # f32 output blocks
    vmem_limit = int(min(100 * 2**20,
                         max(16 * 2**20, 2 * resident + 4 * per_step + (2 << 20))))

    kernel = functools.partial(_fused_gnn_ebm_kernel, L, d)
    hn, he = pl.pallas_call(
        kernel,
        grid=(B,),
        in_specs=in_specs,
        out_specs=out_specs,
        out_shape=out_shape,
        compiler_params=pltpu.CompilerParams(
            dimension_semantics=("parallel",),        # megacore on v7x
            vmem_limit_bytes=vmem_limit),
    )(*operands)

    # slice the lane-dense padded outputs back to the true 2 / 4 logits
    return hn[:, :, :2], he[:, :, :4]


# ----------------------------------------------------------------------------
# Parameter init (torch.nn.Linear-style uniform bounds).
# Weights stored already transposed: y = x @ W + b, W: (in, out), b: (1, out)
# ----------------------------------------------------------------------------
def init_linear(key, in_dim, out_dim):
    kw, kb = jax.random.split(key)
    bound = 1.0 / (in_dim ** 0.5)
    W = jax.random.uniform(kw, (in_dim, out_dim), jnp.float32, -bound, bound)
    b = jax.random.uniform(kb, (1, out_dim), jnp.float32, -bound, bound)
    return W, b


def init_model_params(key, ebm_GNN_dim, ebm_GNN_layer_num):
    d = ebm_GNN_dim
    n_hidden = ebm_GNN_layer_num - 1            # number of GNN_EBM_Layer_01 blocks
    keys = jax.random.split(key, 3 * n_hidden + 6)
    idx = 0
    layers = []
    for _ in range(n_hidden):
        Wn, bn = init_linear(keys[idx], d, d); idx += 1   # node_layer
        Wm, bm = init_linear(keys[idx], d, d); idx += 1   # mlp
        We, be = init_linear(keys[idx], d, d); idx += 1   # edge_layer
        layers.append((Wn, bn, Wm, bm, We, be))
    hidden = d                                  # concat=False
    node_ro = (*init_linear(keys[idx], 2 * hidden, 2 * hidden),
               *init_linear(keys[idx + 1], 2 * hidden, hidden),
               *init_linear(keys[idx + 2], hidden, 2))
    idx += 3
    edge_ro = (*init_linear(keys[idx], 4 * hidden, 2 * hidden),
               *init_linear(keys[idx + 1], 2 * hidden, hidden),
               *init_linear(keys[idx + 2], hidden, 4))
    return layers, node_ro, edge_ro


# ----------------------------------------------------------------------------
# Pure-JAX reference of the PyTorch module (for correctness check)
# ----------------------------------------------------------------------------
def _ref_forward(params, x_1st, x_2nd, edge):
    layers, node_ro, edge_ro = params
    B, T = x_1st.shape[:2]
    M = x_2nd.shape[1]
    hp = jax.lax.Precision.HIGHEST
    mm = lambda a, b: jnp.matmul(a, b, precision=hp)
    i_idx = jnp.array([0, 0, 1, 1])
    j_idx = jnp.array([0, 1, 0, 1])

    def scatter_nodes(vals, idx):        # vals: (B, M, d) -> (B, T, d)
        return jnp.zeros((B, T, vals.shape[-1]), vals.dtype).at[:, idx, :].add(vals)

    xn, xe = x_1st.astype(jnp.float32), x_2nd.astype(jnp.float32)
    L = len(layers)
    for li, (Wn, bn, Wm, bm, We, be) in enumerate(layers):
        agg_neg = xe[:, :, 0] + xe[:, :, 1]
        agg_pos = xe[:, :, 2] + xe[:, :, 3]

        def mp(x, a):
            upd = (scatter_nodes(a, edge[1]) + scatter_nodes(a, edge[0])) / 2
            return x + upd

        x_new = jnp.stack([mp(xn[:, :, 0], agg_neg), mp(xn[:, :, 1], agg_pos)], axis=2)
        x_new = mm(x_new, Wn) + bn
        edge_i = xn[:, edge[0]][:, :, i_idx, :]
        edge_j = xn[:, edge[1]][:, :, j_idx, :]
        e_new = xe + mm(edge_i + edge_j, Wm) + bm
        e_new = mm(e_new, We) + be
        if li < L - 1:
            x_new = jax.nn.relu(x_new)
        xn, xe = x_new, e_new

    def mlp3(h, p):
        W1, b1, W2, b2, W3, b3 = p
        h = jax.nn.relu(mm(h, W1) + b1)
        h = jax.nn.relu(mm(h, W2) + b2)
        return mm(h, W3) + b3

    return mlp3(xn.reshape(B, T, -1), node_ro), mlp3(xe.reshape(B, M, -1), edge_ro)


if __name__ == "__main__":
    B, T, M, d = 2, 8, 12, 32
    ebm_GNN_layer_num = 3      # -> 2 GNN_EBM_Layer_01 blocks

    key = jax.random.PRNGKey(0)
    k_params, k_x1, k_x2, k_e0, k_e1 = jax.random.split(key, 5)

    params = init_model_params(k_params, d, ebm_GNN_layer_num)
    x_1st = jax.random.normal(k_x1, (B, T, 2, d), jnp.float32)
    x_2nd = jax.random.normal(k_x2, (B, M, 4, d), jnp.float32)
    edge = jnp.stack([jax.random.randint(k_e0, (M,), 0, T),
                      jax.random.randint(k_e1, (M,), 0, T)], axis=0).astype(jnp.int32)

    # one-time packing (hoisted out of the jitted forward path)
    packed = jax.block_until_ready(pack_model(params, edge, T))

    h_node, h_edge = gnn_energy_model_forward(packed, x_1st, x_2nd)
    jax.block_until_ready((h_node, h_edge))
    assert h_node.shape == (B, T, 2), h_node.shape
    assert h_edge.shape == (B, M, 4), h_edge.shape

    # correctness check against the pure-JAX f32 (HIGHEST) reference; tolerance
    # loosened vs. the pure-f32 kernel because matmul operands are now bf16
    # (f32 accumulation) across ~5 chained matmul stages.
    ref_node, ref_edge = _ref_forward(params, x_1st, x_2nd, edge)
    np.testing.assert_allclose(np.asarray(h_node), np.asarray(ref_node), rtol=5e-2, atol=1e-1)
    np.testing.assert_allclose(np.asarray(h_edge), np.asarray(ref_edge), rtol=5e-2, atol=1e-1)

    print("KERNEL_OK")
</pallas_src>

<mosaic_0001>
module attributes {stable_mosaic.version = 11 : i64} {
  func.func @_fused_gnn_ebm_kernel(%arg0: i32, %arg1: memref<1x8x64xbf16, #tpu.memory_space<vmem>>, %arg2: memref<1x12x128xbf16, #tpu.memory_space<vmem>>, %arg3: memref<8x12xbf16, #tpu.memory_space<vmem>>, %arg4: memref<12x16xbf16, #tpu.memory_space<vmem>>, %arg5: memref<2x192x64xbf16, #tpu.memory_space<vmem>>, %arg6: memref<2x1x64xf32, #tpu.memory_space<vmem>>, %arg7: memref<2x64x256xbf16, #tpu.memory_space<vmem>>, %arg8: memref<2x1x128xf32, #tpu.memory_space<vmem>>, %arg9: memref<2x128x128xbf16, #tpu.memory_space<vmem>>, %arg10: memref<2x1x128xf32, #tpu.memory_space<vmem>>, %arg11: memref<64x64xbf16, #tpu.memory_space<vmem>>, %arg12: memref<1x64xf32, #tpu.memory_space<vmem>>, %arg13: memref<64x32xbf16, #tpu.memory_space<vmem>>, %arg14: memref<1x32xf32, #tpu.memory_space<vmem>>, %arg15: memref<32x128xbf16, #tpu.memory_space<vmem>>, %arg16: memref<1x128xf32, #tpu.memory_space<vmem>>, %arg17: memref<128x64xbf16, #tpu.memory_space<vmem>>, %arg18: memref<1x64xf32, #tpu.memory_space<vmem>>, %arg19: memref<64x32xbf16, #tpu.memory_space<vmem>>, %arg20: memref<1x32xf32, #tpu.memory_space<vmem>>, %arg21: memref<32x128xbf16, #tpu.memory_space<vmem>>, %arg22: memref<1x128xf32, #tpu.memory_space<vmem>>, %arg23: memref<1x8x128xf32, #tpu.memory_space<vmem>>, %arg24: memref<1x12x128xf32, #tpu.memory_space<vmem>>) attributes {dimension_semantics = [#tpu.dimension_semantics<parallel>], iteration_bounds = array<i64: 2>, scalar_prefetch = 0 : i64, scratch_operands = 0 : i64, tpu.core_type = #tpu.core_type<tc>, window_params = [{transform_indices = @transform_0, window_bounds = array<i64: 1, 8, 64>}, {transform_indices = @transform_1, window_bounds = array<i64: 1, 12, 128>}, {pipeline_mode = #tpu.pipeline_mode<synchronous>, transform_indices = @transform_2, window_bounds = array<i64: 8, 12>}, {pipeline_mode = #tpu.pipeline_mode<synchronous>, transform_indices = @transform_3, window_bounds = array<i64: 12, 16>}, {pipeline_mode = #tpu.pipeline_mode<synchronous>, transform_indices = @transform_4, window_bounds = array<i64: 2, 192, 64>}, {pipeline_mode = #tpu.pipeline_mode<synchronous>, transform_indices = @transform_5, window_bounds = array<i64: 2, 1, 64>}, {pipeline_mode = #tpu.pipeline_mode<synchronous>, transform_indices = @transform_6, window_bounds = array<i64: 2, 64, 256>}, {pipeline_mode = #tpu.pipeline_mode<synchronous>, transform_indices = @transform_7, window_bounds = array<i64: 2, 1, 128>}, {pipeline_mode = #tpu.pipeline_mode<synchronous>, transform_indices = @transform_8, window_bounds = array<i64: 2, 128, 128>}, {pipeline_mode = #tpu.pipeline_mode<synchronous>, transform_indices = @transform_9, window_bounds = array<i64: 2, 1, 128>}, {pipeline_mode = #tpu.pipeline_mode<synchronous>, transform_indices = @transform_10, window_bounds = array<i64: 64, 64>}, {pipeline_mode = #tpu.pipeline_mode<synchronous>, transform_indices = @transform_11, window_bounds = array<i64: 1, 64>}, {pipeline_mode = #tpu.pipeline_mode<synchronous>, transform_indices = @transform_12, window_bounds = array<i64: 64, 32>}, {pipeline_mode = #tpu.pipeline_mode<synchronous>, transform_indices = @transform_13, window_bounds = array<i64: 1, 32>}, {pipeline_mode = #tpu.pipeline_mode<synchronous>, transform_indices = @transform_14, window_bounds = array<i64: 32, 128>}, {pipeline_mode = #tpu.pipeline_mode<synchronous>, transform_indices = @transform_15, window_bounds = array<i64: 1, 128>}, {pipeline_mode = #tpu.pipeline_mode<synchronous>, transform_indices = @transform_16, window_bounds = array<i64: 128, 64>}, {pipeline_mode = #tpu.pipeline_mode<synchronous>, transform_indices = @transform_17, window_bounds = array<i64: 1, 64>}, {pipeline_mode = #tpu.pipeline_mode<synchronous>, transform_indices = @transform_18, window_bounds = array<i64: 64, 32>}, {pipeline_mode = #tpu.pipeline_mode<synchronous>, transform_indices = @transform_19, window_bounds = array<i64: 1, 32>}, {pipeline_mode = #tpu.pipeline_mode<synchronous>, transform_indices = @transform_20, window_bounds = array<i64: 32, 128>}, {pipeline_mode = #tpu.pipeline_mode<synchronous>, transform_indices = @transform_21, window_bounds = array<i64: 1, 128>}, {transform_indices = @transform_22, window_bounds = array<i64: 1, 8, 128>}, {transform_indices = @transform_23, window_bounds = array<i64: 1, 12, 128>}]} {
    %c0 = arith.constant 0 : index
    %c0_0 = arith.constant 0 : index
    %c0_1 = arith.constant 0 : index
    %0 = vector.load %arg1[%c0, %c0_0, %c0_1] : memref<1x8x64xbf16, #tpu.memory_space<vmem>>, vector<1x8x64xbf16>
    %1 = vector.shape_cast %0 : vector<1x8x64xbf16> to vector<8x64xbf16>
    %c0_2 = arith.constant 0 : index
    %c0_3 = arith.constant 0 : index
    %c0_4 = arith.constant 0 : index
    %2 = vector.load %arg2[%c0_2, %c0_3, %c0_4] : memref<1x12x128xbf16, #tpu.memory_space<vmem>>, vector<1x12x128xbf16>
    %3 = vector.shape_cast %2 : vector<1x12x128xbf16> to vector<12x128xbf16>
    %c0_5 = arith.constant 0 : index
    %c0_6 = arith.constant 0 : index
    %4 = vector.load %arg3[%c0_5, %c0_6] : memref<8x12xbf16, #tpu.memory_space<vmem>>, vector<8x12xbf16>
    %c0_7 = arith.constant 0 : index
    %c0_8 = arith.constant 0 : index
    %5 = vector.load %arg4[%c0_7, %c0_8] : memref<12x16xbf16, #tpu.memory_space<vmem>>, vector<12x16xbf16>
    %cst = arith.constant dense<0.000000e+00> : vector<8x128xf32>
    %6 = tpu.matmul %4, %3, %cst {dimension_numbers = #tpu.dot_dimension_numbers<[1], [0], [0], [1], [0, 0, 1, 1], [], []>} : vector<8x12xbf16>, vector<12x128xbf16>, vector<8x128xf32> -> vector<8x128xf32>
    %7 = arith.truncf %6 : vector<8x128xf32> to vector<8x128xbf16>
    %8 = tpu.concatenate %7, %1 in 1 : vector<8x128xbf16>, vector<8x64xbf16> -> vector<8x192xbf16>
    %c0_9 = arith.constant 0 : index
    %c0_10 = arith.constant 0 : index
    %c0_11 = arith.constant 0 : index
    %9 = vector.load %arg5[%c0_9, %c0_10, %c0_11] : memref<2x192x64xbf16, #tpu.memory_space<vmem>>, vector<1x192x64xbf16>
    %10 = vector.shape_cast %9 : vector<1x192x64xbf16> to vector<192x64xbf16>
    %cst_12 = arith.constant dense<0.000000e+00> : vector<8x64xf32>
    %11 = tpu.matmul %8, %10, %cst_12 {dimension_numbers = #tpu.dot_dimension_numbers<[1], [0], [0], [1], [0, 0, 1, 1], [], []>} : vector<8x192xbf16>, vector<192x64xbf16>, vector<8x64xf32> -> vector<8x64xf32>
    %c0_13 = arith.constant 0 : index
    %c0_14 = arith.constant 0 : index
    %c0_15 = arith.constant 0 : index
    %12 = vector.load %arg6[%c0_13, %c0_14, %c0_15] : memref<2x1x64xf32, #tpu.memory_space<vmem>>, vector<1x1x64xf32>
    %13 = vector.shape_cast %12 : vector<1x1x64xf32> to vector<1x64xf32>
    %14 = vector.broadcast %13 : vector<1x64xf32> to vector<8x64xf32>
    %15 = arith.addf %11, %14 : vector<8x64xf32>
    %c0_16 = arith.constant 0 : index
    %c0_17 = arith.constant 0 : index
    %c0_18 = arith.constant 0 : index
    %16 = vector.load %arg7[%c0_16, %c0_17, %c0_18] : memref<2x64x256xbf16, #tpu.memory_space<vmem>>, vector<1x64x256xbf16>
    %17 = vector.shape_cast %16 : vector<1x64x256xbf16> to vector<64x256xbf16>
    %cst_19 = arith.constant dense<0.000000e+00> : vector<8x256xf32>
    %18 = tpu.matmul %1, %17, %cst_19 {dimension_numbers = #tpu.dot_dimension_numbers<[1], [0], [0], [1], [0, 0, 1, 1], [], []>} : vector<8x64xbf16>, vector<64x256xbf16>, vector<8x256xf32> -> vector<8x256xf32>
    %19 = arith.truncf %18 : vector<8x256xf32> to vector<8x256xbf16>
    %20 = vector.extract_strided_slice %19 {offsets = [0, 0], sizes = [8, 128], strides = [1, 1]} : vector<8x256xbf16> to vector<8x128xbf16>
    %21 = vector.extract_strided_slice %19 {offsets = [0, 128], sizes = [8, 128], strides = [1, 1]} : vector<8x256xbf16> to vector<8x128xbf16>
    %22 = tpu.concatenate %20, %21 in 0 : vector<8x128xbf16>, vector<8x128xbf16> -> vector<16x128xbf16>
    %cst_20 = arith.constant dense<0.000000e+00> : vector<12x128xf32>
    %23 = tpu.matmul %5, %22, %cst_20 {dimension_numbers = #tpu.dot_dimension_numbers<[1], [0], [0], [1], [0, 0, 1, 1], [], []>} : vector<12x16xbf16>, vector<16x128xbf16>, vector<12x128xf32> -> vector<12x128xf32>
    %c0_21 = arith.constant 0 : index
    %c0_22 = arith.constant 0 : index
    %c0_23 = arith.constant 0 : index
    %24 = vector.load %arg8[%c0_21, %c0_22, %c0_23] : memref<2x1x128xf32, #tpu.memory_space<vmem>>, vector<1x1x128xf32>
    %25 = vector.shape_cast %24 : vector<1x1x128xf32> to vector<1x128xf32>
    %26 = vector.broadcast %25 : vector<1x128xf32> to vector<12x128xf32>
    %27 = arith.addf %23, %26 : vector<12x128xf32>
    %28 = arith.extf %3 : vector<12x128xbf16> to vector<12x128xf32>
    %29 = arith.addf %28, %27 : vector<12x128xf32>
    %30 = arith.truncf %29 : vector<12x128xf32> to vector<12x128xbf16>
    %c0_24 = arith.constant 0 : index
    %c0_25 = arith.constant 0 : index
    %c0_26 = arith.constant 0 : index
    %31 = vector.load %arg9[%c0_24, %c0_25, %c0_26] : memref<2x128x128xbf16, #tpu.memory_space<vmem>>, vector<1x128x128xbf16>
    %32 = vector.shape_cast %31 : vector<1x128x128xbf16> to vector<128x128xbf16>
    %cst_27 = arith.constant dense<0.000000e+00> : vector<12x128xf32>
    %33 = tpu.matmul %30, %32, %cst_27 {dimension_numbers = #tpu.dot_dimension_numbers<[1], [0], [0], [1], [0, 0, 1, 1], [], []>} : vector<12x128xbf16>, vector<128x128xbf16>, vector<12x128xf32> -> vector<12x128xf32>
    %c0_28 = arith.constant 0 : index
    %c0_29 = arith.constant 0 : index
    %c0_30 = arith.constant 0 : index
    %34 = vector.load %arg10[%c0_28, %c0_29, %c0_30] : memref<2x1x128xf32, #tpu.memory_space<vmem>>, vector<1x1x128xf32>
    %35 = vector.shape_cast %34 : vector<1x1x128xf32> to vector<1x128xf32>
    %36 = vector.broadcast %35 : vector<1x128xf32> to vector<12x128xf32>
    %37 = arith.addf %33, %36 : vector<12x128xf32>
    %38 = arith.truncf %37 : vector<12x128xf32> to vector<12x128xbf16>
    %cst_31 = arith.constant 0.000000e+00 : f32
    %39 = vector.broadcast %cst_31 : f32 to vector<8x64xf32>
    %40 = arith.maximumf %15, %39 : vector<8x64xf32>
    %41 = arith.truncf %40 : vector<8x64xf32> to vector<8x64xbf16>
    %cst_32 = arith.constant dense<0.000000e+00> : vector<8x128xf32>
    %42 = tpu.matmul %4, %38, %cst_32 {dimension_numbers = #tpu.dot_dimension_numbers<[1], [0], [0], [1], [0, 0, 1, 1], [], []>} : vector<8x12xbf16>, vector<12x128xbf16>, vector<8x128xf32> -> vector<8x128xf32>
    %43 = arith.truncf %42 : vector<8x128xf32> to vector<8x128xbf16>
    %44 = tpu.concatenate %43, %41 in 1 : vector<8x128xbf16>, vector<8x64xbf16> -> vector<8x192xbf16>
    %c1 = arith.constant 1 : index
    %c0_33 = arith.constant 0 : index
    %c0_34 = arith.constant 0 : index
    %45 = vector.load %arg5[%c1, %c0_33, %c0_34] : memref<2x192x64xbf16, #tpu.memory_space<vmem>>, vector<1x192x64xbf16>
    %46 = vector.shape_cast %45 : vector<1x192x64xbf16> to vector<192x64xbf16>
    %cst_35 = arith.constant dense<0.000000e+00> : vector<8x64xf32>
    %47 = tpu.matmul %44, %46, %cst_35 {dimension_numbers = #tpu.dot_dimension_numbers<[1], [0], [0], [1], [0, 0, 1, 1], [], []>} : vector<8x192xbf16>, vector<192x64xbf16>, vector<8x64xf32> -> vector<8x64xf32>
    %c1_36 = arith.constant 1 : index
    %c0_37 = arith.constant 0 : index
    %c0_38 = arith.constant 0 : index
    %48 = vector.load %arg6[%c1_36, %c0_37, %c0_38] : memref<2x1x64xf32, #tpu.memory_space<vmem>>, vector<1x1x64xf32>
    %49 = vector.shape_cast %48 : vector<1x1x64xf32> to vector<1x64xf32>
    %50 = vector.broadcast %49 : vector<1x64xf32> to vector<8x64xf32>
    %51 = arith.addf %47, %50 : vector<8x64xf32>
    %c1_39 = arith.constant 1 : index
    %c0_40 = arith.constant 0 : index
    %c0_41 = arith.constant 0 : index
    %52 = vector.load %arg7[%c1_39, %c0_40, %c0_41] : memref<2x64x256xbf16, #tpu.memory_space<vmem>>, vector<1x64x256xbf16>
    %53 = vector.shape_cast %52 : vector<1x64x256xbf16> to vector<64x256xbf16>
    %cst_42 = arith.constant dense<0.000000e+00> : vector<8x256xf32>
    %54 = tpu.matmul %41, %53, %cst_42 {dimension_numbers = #tpu.dot_dimension_numbers<[1], [0], [0], [1], [0, 0, 1, 1], [], []>} : vector<8x64xbf16>, vector<64x256xbf16>, vector<8x256xf32> -> vector<8x256xf32>
    %55 = arith.truncf %54 : vector<8x256xf32> to vector<8x256xbf16>
    %56 = vector.extract_strided_slice %55 {offsets = [0, 0], sizes = [8, 128], strides = [1, 1]} : vector<8x256xbf16> to vector<8x128xbf16>
    %57 = vector.extract_strided_slice %55 {offsets = [0, 128], sizes = [8, 128], strides = [1, 1]} : vector<8x256xbf16> to vector<8x128xbf16>
    %58 = tpu.concatenate %56, %57 in 0 : vector<8x128xbf16>, vector<8x128xbf16> -> vector<16x128xbf16>
    %cst_43 = arith.constant dense<0.000000e+00> : vector<12x128xf32>
    %59 = tpu.matmul %5, %58, %cst_43 {dimension_numbers = #tpu.dot_dimension_numbers<[1], [0], [0], [1], [0, 0, 1, 1], [], []>} : vector<12x16xbf16>, vector<16x128xbf16>, vector<12x128xf32> -> vector<12x128xf32>
    %c1_44 = arith.constant 1 : index
    %c0_45 = arith.constant 0 : index
    %c0_46 = arith.constant 0 : index
    %60 = vector.load %arg8[%c1_44, %c0_45, %c0_46] : memref<2x1x128xf32, #tpu.memory_space<vmem>>, vector<1x1x128xf32>
    %61 = vector.shape_cast %60 : vector<1x1x128xf32> to vector<1x128xf32>
    %62 = vector.broadcast %61 : vector<1x128xf32> to vector<12x128xf32>
    %63 = arith.addf %59, %62 : vector<12x128xf32>
    %64 = arith.extf %38 : vector<12x128xbf16> to vector<12x128xf32>
    %65 = arith.addf %64, %63 : vector<12x128xf32>
    %66 = arith.truncf %65 : vector<12x128xf32> to vector<12x128xbf16>
    %c1_47 = arith.constant 1 : index
    %c0_48 = arith.constant 0 : index
    %c0_49 = arith.constant 0 : index
    %67 = vector.load %arg9[%c1_47, %c0_48, %c0_49] : memref<2x128x128xbf16, #tpu.memory_space<vmem>>, vector<1x128x128xbf16>
    %68 = vector.shape_cast %67 : vector<1x128x128xbf16> to vector<128x128xbf16>
    %cst_50 = arith.constant dense<0.000000e+00> : vector<12x128xf32>
    %69 = tpu.matmul %66, %68, %cst_50 {dimension_numbers = #tpu.dot_dimension_numbers<[1], [0], [0], [1], [0, 0, 1, 1], [], []>} : vector<12x128xbf16>, vector<128x128xbf16>, vector<12x128xf32> -> vector<12x128xf32>
    %c1_51 = arith.constant 1 : index
    %c0_52 = arith.constant 0 : index
    %c0_53 = arith.constant 0 : index
    %70 = vector.load %arg10[%c1_51, %c0_52, %c0_53] : memref<2x1x128xf32, #tpu.memory_space<vmem>>, vector<1x1x128xf32>
    %71 = vector.shape_cast %70 : vector<1x1x128xf32> to vector<1x128xf32>
    %72 = vector.broadcast %71 : vector<1x128xf32> to vector<12x128xf32>
    %73 = arith.addf %69, %72 : vector<12x128xf32>
    %74 = arith.truncf %73 : vector<12x128xf32> to vector<12x128xbf16>
    %75 = arith.truncf %51 : vector<8x64xf32> to vector<8x64xbf16>
    %c0_54 = arith.constant 0 : index
    %c0_55 = arith.constant 0 : index
    %76 = vector.load %arg11[%c0_54, %c0_55] : memref<64x64xbf16, #tpu.memory_space<vmem>>, vector<64x64xbf16>
    %cst_56 = arith.constant dense<0.000000e+00> : vector<8x64xf32>
    %77 = tpu.matmul %75, %76, %cst_56 {dimension_numbers = #tpu.dot_dimension_numbers<[1], [0], [0], [1], [0, 0, 1, 1], [], []>} : vector<8x64xbf16>, vector<64x64xbf16>, vector<8x64xf32> -> vector<8x64xf32>
    %c0_57 = arith.constant 0 : index
    %c0_58 = arith.constant 0 : index
    %78 = vector.load %arg12[%c0_57, %c0_58] : memref<1x64xf32, #tpu.memory_space<vmem>>, vector<1x64xf32>
    %79 = vector.broadcast %78 : vector<1x64xf32> to vector<8x64xf32>
    %80 = arith.addf %77, %79 : vector<8x64xf32>
    %cst_59 = arith.constant 0.000000e+00 : f32
    %81 = vector.broadcast %cst_59 : f32 to vector<8x64xf32>
    %82 = arith.maximumf %80, %81 : vector<8x64xf32>
    %83 = arith.truncf %82 : vector<8x64xf32> to vector<8x64xbf16>
    %c0_60 = arith.constant 0 : index
    %c0_61 = arith.constant 0 : index
    %84 = vector.load %arg13[%c0_60, %c0_61] : memref<64x32xbf16, #tpu.memory_space<vmem>>, vector<64x32xbf16>
    %cst_62 = arith.constant dense<0.000000e+00> : vector<8x32xf32>
    %85 = tpu.matmul %83, %84, %cst_62 {dimension_numbers = #tpu.dot_dimension_numbers<[1], [0], [0], [1], [0, 0, 1, 1], [], []>} : vector<8x64xbf16>, vector<64x32xbf16>, vector<8x32xf32> -> vector<8x32xf32>
    %c0_63 = arith.constant 0 : index
    %c0_64 = arith.constant 0 : index
    %86 = vector.load %arg14[%c0_63, %c0_64] : memref<1x32xf32, #tpu.memory_space<vmem>>, vector<1x32xf32>
    %87 = vector.broadcast %86 : vector<1x32xf32> to vector<8x32xf32>
    %88 = arith.addf %85, %87 : vector<8x32xf32>
    %cst_65 = arith.constant 0.000000e+00 : f32
    %89 = vector.broadcast %cst_65 : f32 to vector<8x32xf32>
    %90 = arith.maximumf %88, %89 : vector<8x32xf32>
    %91 = arith.truncf %90 : vector<8x32xf32> to vector<8x32xbf16>
    %c0_66 = arith.constant 0 : index
    %c0_67 = arith.constant 0 : index
    %92 = vector.load %arg15[%c0_66, %c0_67] : memref<32x128xbf16, #tpu.memory_space<vmem>>, vector<32x128xbf16>
    %cst_68 = arith.constant dense<0.000000e+00> : vector<8x128xf32>
    %93 = tpu.matmul %91, %92, %cst_68 {dimension_numbers = #tpu.dot_dimension_numbers<[1], [0], [0], [1], [0, 0, 1, 1], [], []>} : vector<8x32xbf16>, vector<32x128xbf16>, vector<8x128xf32> -> vector<8x128xf32>
    %c0_69 = arith.constant 0 : index
    %c0_70 = arith.constant 0 : index
    %94 = vector.load %arg16[%c0_69, %c0_70] : memref<1x128xf32, #tpu.memory_space<vmem>>, vector<1x128xf32>
    %95 = vector.broadcast %94 : vector<1x128xf32> to vector<8x128xf32>
    %96 = arith.addf %93, %95 : vector<8x128xf32>
    %c0_71 = arith.constant 0 : index
    %c0_72 = arith.constant 0 : index
    %c0_73 = arith.constant 0 : index
    %97 = vector.load %arg23[%c0_71, %c0_72, %c0_73] : memref<1x8x128xf32, #tpu.memory_space<vmem>>, vector<1x8x128xf32>
    %98 = vector.shape_cast %97 : vector<1x8x128xf32> to vector<8x128xf32>
    %99 = vector.shape_cast %96 : vector<8x128xf32> to vector<1x8x128xf32>
    tpu.vector_store %arg23[%c0_71, %c0_72, %c0_73], %99 {strides = array<i32>} : memref<1x8x128xf32, #tpu.memory_space<vmem>>, vector<1x8x128xf32>,
    %c0_74 = arith.constant 0 : index
    %c0_75 = arith.constant 0 : index
    %100 = vector.load %arg17[%c0_74, %c0_75] : memref<128x64xbf16, #tpu.memory_space<vmem>>, vector<128x64xbf16>
    %cst_76 = arith.constant dense<0.000000e+00> : vector<12x64xf32>
    %101 = tpu.matmul %74, %100, %cst_76 {dimension_numbers = #tpu.dot_dimension_numbers<[1], [0], [0], [1], [0, 0, 1, 1], [], []>} : vector<12x128xbf16>, vector<128x64xbf16>, vector<12x64xf32> -> vector<12x64xf32>
    %c0_77 = arith.constant 0 : index
    %c0_78 = arith.constant 0 : index
    %102 = vector.load %arg18[%c0_77, %c0_78] : memref<1x64xf32, #tpu.memory_space<vmem>>, vector<1x64xf32>
    %103 = vector.broadcast %102 : vector<1x64xf32> to vector<12x64xf32>
    %104 = arith.addf %101, %103 : vector<12x64xf32>
    %cst_79 = arith.constant 0.000000e+00 : f32
    %105 = vector.broadcast %cst_79 : f32 to vector<12x64xf32>
    %106 = arith.maximumf %104, %105 : vector<12x64xf32>
    %107 = arith.truncf %106 : vector<12x64xf32> to vector<12x64xbf16>
    %c0_80 = arith.constant 0 : index
    %c0_81 = arith.constant 0 : index
    %108 = vector.load %arg19[%c0_80, %c0_81] : memref<64x32xbf16, #tpu.memory_space<vmem>>, vector<64x32xbf16>
    %cst_82 = arith.constant dense<0.000000e+00> : vector<12x32xf32>
    %109 = tpu.matmul %107, %108, %cst_82 {dimension_numbers = #tpu.dot_dimension_numbers<[1], [0], [0], [1], [0, 0, 1, 1], [], []>} : vector<12x64xbf16>, vector<64x32xbf16>, vector<12x32xf32> -> vector<12x32xf32>
    %c0_83 = arith.constant 0 : index
    %c0_84 = arith.constant 0 : index
    %110 = vector.load %arg20[%c0_83, %c0_84] : memref<1x32xf32, #tpu.memory_space<vmem>>, vector<1x32xf32>
    %111 = vector.broadcast %110 : vector<1x32xf32> to vector<12x32xf32>
    %112 = arith.addf %109, %111 : vector<12x32xf32>
    %cst_85 = arith.constant 0.000000e+00 : f32
    %113 = vector.broadcast %cst_85 : f32 to vector<12x32xf32>
    %114 = arith.maximumf %112, %113 : vector<12x32xf32>
    %115 = arith.truncf %114 : vector<12x32xf32> to vector<12x32xbf16>
    %c0_86 = arith.constant 0 : index
    %c0_87 = arith.constant 0 : index
    %116 = vector.load %arg21[%c0_86, %c0_87] : memref<32x128xbf16, #tpu.memory_space<vmem>>, vector<32x128xbf16>
    %cst_88 = arith.constant dense<0.000000e+00> : vector<12x128xf32>
    %117 = tpu.matmul %115, %116, %cst_88 {dimension_numbers = #tpu.dot_dimension_numbers<[1], [0], [0], [1], [0, 0, 1, 1], [], []>} : vector<12x32xbf16>, vector<32x128xbf16>, vector<12x128xf32> -> vector<12x128xf32>
    %c0_89 = arith.constant 0 : index
    %c0_90 = arith.constant 0 : index
    %118 = vector.load %arg22[%c0_89, %c0_90] : memref<1x128xf32, #tpu.memory_space<vmem>>, vector<1x128xf32>
    %119 = vector.broadcast %118 : vector<1x128xf32> to vector<12x128xf32>
    %120 = arith.addf %117, %119 : vector<12x128xf32>
    %c0_91 = arith.constant 0 : index
    %c0_92 = arith.constant 0 : index
    %c0_93 = arith.constant 0 : index
    %121 = vector.load %arg24[%c0_91, %c0_92, %c0_93] : memref<1x12x128xf32, #tpu.memory_space<vmem>>, vector<1x12x128xf32>
    %122 = vector.shape_cast %121 : vector<1x12x128xf32> to vector<12x128xf32>
    %123 = vector.shape_cast %120 : vector<12x128xf32> to vector<1x12x128xf32>
    tpu.vector_store %arg24[%c0_91, %c0_92, %c0_93], %123 {strides = array<i32>} : memref<1x12x128xf32, #tpu.memory_space<vmem>>, vector<1x12x128xf32>,
    return
  }
  func.func @transform_0(%arg0: i32) -> (i32, i32, i32) {
    %c0_i32 = arith.constant 0 : i32
    %c0_i32_0 = arith.constant 0 : i32
    %c0_i32_1 = arith.constant 0 : i32
    return %arg0, %c0_i32, %c0_i32_0 : i32, i32, i32
  }
  func.func @transform_1(%arg0: i32) -> (i32, i32, i32) {
    %c0_i32 = arith.constant 0 : i32
    %c0_i32_0 = arith.constant 0 : i32
    %c0_i32_1 = arith.constant 0 : i32
    return %arg0, %c0_i32, %c0_i32_0 : i32, i32, i32
  }
  func.func @transform_2(%arg0: i32) -> (i32, i32) {
    %c0_i32 = arith.constant 0 : i32
    %c0_i32_0 = arith.constant 0 : i32
    %c0_i32_1 = arith.constant 0 : i32
    return %c0_i32, %c0_i32_0 : i32, i32
  }
  func.func @transform_3(%arg0: i32) -> (i32, i32) {
    %c0_i32 = arith.constant 0 : i32
    %c0_i32_0 = arith.constant 0 : i32
    %c0_i32_1 = arith.constant 0 : i32
    return %c0_i32, %c0_i32_0 : i32, i32
  }
  func.func @transform_4(%arg0: i32) -> (i32, i32, i32) {
    %c0_i32 = arith.constant 0 : i32
    %c0_i32_0 = arith.constant 0 : i32
    %c0_i32_1 = arith.constant 0 : i32
    %c0_i32_2 = arith.constant 0 : i32
    return %c0_i32, %c0_i32_0, %c0_i32_1 : i32, i32, i32
  }
  func.func @transform_5(%arg0: i32) -> (i32, i32, i32) {
    %c0_i32 = arith.constant 0 : i32
    %c0_i32_0 = arith.constant 0 : i32
    %c0_i32_1 = arith.constant 0 : i32
    %c0_i32_2 = arith.constant 0 : i32
    return %c0_i32, %c0_i32_0, %c0_i32_1 : i32, i32, i32
  }
  func.func @transform_6(%arg0: i32) -> (i32, i32, i32) {
    %c0_i32 = arith.constant 0 : i32
    %c0_i32_0 = arith.constant 0 : i32
    %c0_i32_1 = arith.constant 0 : i32
    %c0_i32_2 = arith.constant 0 : i32
    return %c0_i32, %c0_i32_0, %c0_i32_1 : i32, i32, i32
  }
  func.func @transform_7(%arg0: i32) -> (i32, i32, i32) {
    %c0_i32 = arith.constant 0 : i32
    %c0_i32_0 = arith.constant 0 : i32
    %c0_i32_1 = arith.constant 0 : i32
    %c0_i32_2 = arith.constant 0 : i32
    return %c0_i32, %c0_i32_0, %c0_i32_1 : i32, i32, i32
  }
  func.func @transform_8(%arg0: i32) -> (i32, i32, i32) {
    %c0_i32 = arith.constant 0 : i32
    %c0_i32_0 = arith.constant 0 : i32
    %c0_i32_1 = arith.constant 0 : i32
    %c0_i32_2 = arith.constant 0 : i32
    return %c0_i32, %c0_i32_0, %c0_i32_1 : i32, i32, i32
  }
  func.func @transform_9(%arg0: i32) -> (i32, i32, i32) {
    %c0_i32 = arith.constant 0 : i32
    %c0_i32_0 = arith.constant 0 : i32
    %c0_i32_1 = arith.constant 0 : i32
    %c0_i32_2 = arith.constant 0 : i32
    return %c0_i32, %c0_i32_0, %c0_i32_1 : i32, i32, i32
  }
  func.func @transform_10(%arg0: i32) -> (i32, i32) {
    %c0_i32 = arith.constant 0 : i32
    %c0_i32_0 = arith.constant 0 : i32
    %c0_i32_1 = arith.constant 0 : i32
    return %c0_i32, %c0_i32_0 : i32, i32
  }
  func.func @transform_11(%arg0: i32) -> (i32, i32) {
    %c0_i32 = arith.constant 0 : i32
    %c0_i32_0 = arith.constant 0 : i32
    %c0_i32_1 = arith.constant 0 : i32
    return %c0_i32, %c0_i32_0 : i32, i32
  }
  func.func @transform_12(%arg0: i32) -> (i32, i32) {
    %c0_i32 = arith.constant 0 : i32
    %c0_i32_0 = arith.constant 0 : i32
    %c0_i32_1 = arith.constant 0 : i32
    return %c0_i32, %c0_i32_0 : i32, i32
  }
  func.func @transform_13(%arg0: i32) -> (i32, i32) {
    %c0_i32 = arith.constant 0 : i32
    %c0_i32_0 = arith.constant 0 : i32
    %c0_i32_1 = arith.constant 0 : i32
    return %c0_i32, %c0_i32_0 : i32, i32
  }
  func.func @transform_14(%arg0: i32) -> (i32, i32) {
    %c0_i32 = arith.constant 0 : i32
    %c0_i32_0 = arith.constant 0 : i32
    %c0_i32_1 = arith.constant 0 : i32
    return %c0_i32, %c0_i32_0 : i32, i32
  }
  func.func @transform_15(%arg0: i32) -> (i32, i32) {
    %c0_i32 = arith.constant 0 : i32
    %c0_i32_0 = arith.constant 0 : i32
    %c0_i32_1 = arith.constant 0 : i32
    return %c0_i32, %c0_i32_0 : i32, i32
  }
  func.func @transform_16(%arg0: i32) -> (i32, i32) {
    %c0_i32 = arith.constant 0 : i32
    %c0_i32_0 = arith.constant 0 : i32
    %c0_i32_1 = arith.constant 0 : i32
    return %c0_i32, %c0_i32_0 : i32, i32
  }
  func.func @transform_17(%arg0: i32) -> (i32, i32) {
    %c0_i32 = arith.constant 0 : i32
    %c0_i32_0 = arith.constant 0 : i32
    %c0_i32_1 = arith.constant 0 : i32
    return %c0_i32, %c0_i32_0 : i32, i32
  }
  func.func @transform_18(%arg0: i32) -> (i32, i32) {
    %c0_i32 = arith.constant 0 : i32
    %c0_i32_0 = arith.constant 0 : i32
    %c0_i32_1 = arith.constant 0 : i32
    return %c0_i32, %c0_i32_0 : i32, i32
  }
  func.func @transform_19(%arg0: i32) -> (i32, i32) {
    %c0_i32 = arith.constant 0 : i32
    %c0_i32_0 = arith.constant 0 : i32
    %c0_i32_1 = arith.constant 0 : i32
    return %c0_i32, %c0_i32_0 : i32, i32
  }
  func.func @transform_20(%arg0: i32) -> (i32, i32) {
    %c0_i32 = arith.constant 0 : i32
    %c0_i32_0 = arith.constant 0 : i32
    %c0_i32_1 = arith.constant 0 : i32
    return %c0_i32, %c0_i32_0 : i32, i32
  }
  func.func @transform_21(%arg0: i32) -> (i32, i32) {
    %c0_i32 = arith.constant 0 : i32
    %c0_i32_0 = arith.constant 0 : i32
    %c0_i32_1 = arith.constant 0 : i32
    return %c0_i32, %c0_i32_0 : i32, i32
  }
  func.func @transform_22(%arg0: i32) -> (i32, i32, i32) {
    %c0_i32 = arith.constant 0 : i32
    %c0_i32_0 = arith.constant 0 : i32
    %c0_i32_1 = arith.constant 0 : i32
    return %arg0, %c0_i32, %c0_i32_0 : i32, i32, i32
  }
  func.func @transform_23(%arg0: i32) -> (i32, i32, i32) {
    %c0_i32 = arith.constant 0 : i32
    %c0_i32_0 = arith.constant 0 : i32
    %c0_i32_1 = arith.constant 0 : i32
    return %arg0, %c0_i32, %c0_i32_0 : i32, i32, i32
  }
}

</mosaic_0001>

<llo_original>
// kernel: gnn_energy_model_forward.1
$region0: #{gnn_energy_model_forward.1}
  #allocation0 [shape = 'u32[]', space=smem, size = 0x4, offset = 0x4, fixed_abs, tag = 'smem constant byte address 0x4 - core index']
  #allocation1 [shape = 'u32[144,128]{1,0:T(1,128)}', space=vmem, size = 0x12000, scoped, tag = 'internal scratch']
  %s0 = inlined_call_operand.vmem [shape: bf16[2,8,64], index: 0, kind: input, shape index: {}]
  %s1 = inlined_call_operand.vmem [shape: bf16[2,12,128], index: 1, kind: input, shape index: {}]
  %s2 = inlined_call_operand.vmem [shape: bf16[8,12], index: 2, kind: input, shape index: {}]
  %s3 = inlined_call_operand.vmem [shape: bf16[12,16], index: 3, kind: input, shape index: {}]
  %s4 = inlined_call_operand.vmem [shape: bf16[2,192,64], index: 4, kind: input, shape index: {}]
  %s5 = inlined_call_operand.vmem [shape: f32[2,1,64], index: 5, kind: input, shape index: {}]
  %s6 = inlined_call_operand.vmem [shape: bf16[2,64,256], index: 6, kind: input, shape index: {}]
  %s7 = inlined_call_operand.vmem [shape: f32[2,1,128], index: 7, kind: input, shape index: {}]
  %s8 = inlined_call_operand.vmem [shape: bf16[2,128,128], index: 8, kind: input, shape index: {}]
  %s9 = inlined_call_operand.vmem [shape: f32[2,1,128], index: 9, kind: input, shape index: {}]
  %s10 = inlined_call_operand.vmem [shape: bf16[64,64], index: 10, kind: input, shape index: {}]
  %s11 = inlined_call_operand.vmem [shape: f32[1,64], index: 11, kind: input, shape index: {}]
  %s12 = inlined_call_operand.vmem [shape: bf16[64,32], index: 12, kind: input, shape index: {}]
  %s13 = inlined_call_operand.vmem [shape: f32[1,32], index: 13, kind: input, shape index: {}]
  %s14 = inlined_call_operand.vmem [shape: bf16[32,128], index: 14, kind: input, shape index: {}]
  %s15 = inlined_call_operand.vmem [shape: f32[1,128], index: 15, kind: input, shape index: {}]
  %s16 = inlined_call_operand.vmem [shape: bf16[128,64], index: 16, kind: input, shape index: {}]
  %s17 = inlined_call_operand.vmem [shape: f32[1,64], index: 17, kind: input, shape index: {}]
  %s18 = inlined_call_operand.vmem [shape: bf16[64,32], index: 18, kind: input, shape index: {}]
  %s19 = inlined_call_operand.vmem [shape: f32[1,32], index: 19, kind: input, shape index: {}]
  %s20 = inlined_call_operand.vmem [shape: bf16[32,128], index: 20, kind: input, shape index: {}]
  %s21 = inlined_call_operand.vmem [shape: f32[1,128], index: 21, kind: input, shape index: {}]
  %s22 = inlined_call_operand.vmem [shape: f32[2,8,128], index: 22, kind: output, shape index: {0}]
  %s23 = inlined_call_operand.vmem [shape: f32[2,12,128], index: 23, kind: output, shape index: {1}]
  %24 = xla_tuple %s22, %s23
  %s25 = sld [smem:[#allocation0]]
  $region129: #{gnn_energy_model_forward.1} parent=0
    _
  %s27 = ssub.s32 1, %s25
  %s28 = scalar_select 0, %s27, %s25
  loop: start=0, step=1, limit=4
  $region2: #{gnn_energy_model_forward.1} parent=0 // loop_pre_header
    _
  $region3: #{gnn_energy_model_forward.1} parent=0 // loop_header
    %s30 = sphi 0, %s34
    %p31 = scmp.ge.s32.totalorder %s30, 4
    %s40 = sphi 0, %s42
    %s43 = sphi 0, %s40
    %s44 = sphi 0, %s43
    %s60 = sphi 0, %s44
    %s66 = sphi 0, %s68
    %s69 = sphi 0, %s66
    %s70 = sphi 0, %s69
    %s86 = sphi 0, %s70
    %s90 = sphi 0, %s90
    %s92 = sphi 0, %s90
    %s93 = sphi 0, %s92
    %s107 = sphi 0, %s93
    %s111 = sphi 0, %s111
    %s113 = sphi 0, %s111
    %s114 = sphi 0, %s113
    %s128 = sphi 0, %s114
    %s132 = sphi 0, %s132
    %s134 = sphi 0, %s132
    %s135 = sphi 0, %s134
    %s149 = sphi 0, %s135
    %s153 = sphi 0, %s153
    %s155 = sphi 0, %s153
    %s156 = sphi 0, %s155
    %s170 = sphi 0, %s156
    %s174 = sphi 0, %s174
    %s176 = sphi 0, %s174
    %s177 = sphi 0, %s176
    %s191 = sphi 0, %s177
    %s195 = sphi 0, %s195
    %s197 = sphi 0, %s195
    %s198 = sphi 0, %s197
    %s212 = sphi 0, %s198
    %s216 = sphi 0, %s216
    %s218 = sphi 0, %s216
    %s219 = sphi 0, %s218
    %s233 = sphi 0, %s219
    %s237 = sphi 0, %s237
    %s239 = sphi 0, %s237
    %s240 = sphi 0, %s239
    %s254 = sphi 0, %s240
    %s258 = sphi 0, %s258
    %s260 = sphi 0, %s258
    %s261 = sphi 0, %s260
    %s275 = sphi 0, %s261
    %s279 = sphi 0, %s279
    %s281 = sphi 0, %s279
    %s282 = sphi 0, %s281
    %s296 = sphi 0, %s282
    %s300 = sphi 0, %s300
    %s302 = sphi 0, %s300
    %s303 = sphi 0, %s302
    %s317 = sphi 0, %s303
    %s321 = sphi 0, %s321
    %s323 = sphi 0, %s321
    %s324 = sphi 0, %s323
    %s338 = sphi 0, %s324
    %s342 = sphi 0, %s342
    %s344 = sphi 0, %s342
    %s345 = sphi 0, %s344
    %s359 = sphi 0, %s345
    %s363 = sphi 0, %s363
    %s365 = sphi 0, %s363
    %s366 = sphi 0, %s365
    %s380 = sphi 0, %s366
    %s384 = sphi 0, %s384
    %s386 = sphi 0, %s384
    %s387 = sphi 0, %s386
    %s401 = sphi 0, %s387
    %s405 = sphi 0, %s405
    %s407 = sphi 0, %s405
    %s408 = sphi 0, %s407
    %s422 = sphi 0, %s408
    %s426 = sphi 0, %s426
    %s428 = sphi 0, %s426
    %s429 = sphi 0, %s428
    %s443 = sphi 0, %s429
    %s447 = sphi 0, %s447
    %s449 = sphi 0, %s447
    %s450 = sphi 0, %s449
    %s464 = sphi 0, %s450
    %s468 = sphi 0, %s468
    %s470 = sphi 0, %s468
    %s471 = sphi 0, %s470
    %s485 = sphi 0, %s471
    %s489 = sphi 0, %s489
    %s491 = sphi 0, %s489
    %s492 = sphi 0, %s491
    %s506 = sphi 0, %s492
    %s512 = sphi 0, %s514
    %s515 = sphi 0, %s512
    %s516 = sphi 0, %s515
    %s532 = sphi 0, %s516
    %s538 = sphi 0, %s540
    %s541 = sphi 0, %s538
    %s542 = sphi 0, %s541
    %s558 = sphi 0, %s542
  $region4: #{gnn_energy_model_forward.1} parent=0 // loop_header_branch
    %33 = sbr.rel (%p31) target = $region8
  $region5: #{gnn_energy_model_forward.1} parent=0 // loop_body
    %s35 = ssub.s32 %s30, 1
    %s36 = ssub.s32 %s30, 2
    %s37 = sadd.s32 %s30, 1
    %s38 = ssub.s32 %s30, %s37
    %p39 = scmp.eq.s32.totalorder %s38, 0
    %s41 = sadd.s32 %s40, 1
    %s42 = scalar_select %p39, %s40, %s41
    %p45 = pneg %p39
    %p46 = scmp.eq.s32.totalorder %s30, 1
    %p47 = por %p45, %p46
    %p48 = scmp.ne.s32.totalorder %s40, %s43
    %p49 = scmp.eq.s32.totalorder %s30, 0
    %p50 = por %p48, %p49
    %p51 = scmp.ne.s32.totalorder %s40, %s43
    %p52 = scmp.eq.s32.totalorder %s35, 1
    %p53 = por %p51, %p52
    %p54 = scmp.ne.s32.totalorder %s43, %s44
    %p55 = scmp.eq.s32.totalorder %s35, 0
    %p56 = por %p54, %p55
    %p57 = scmp.ne.s32.totalorder %s43, %s44
    %p58 = scmp.eq.s32.totalorder %s36, 1
    %p59 = por %p57, %p58
    %p61 = scmp.ne.s32.totalorder %s44, %s60
    %p62 = scmp.eq.s32.totalorder %s36, 0
    %p63 = por %p61, %p62
    %s64 = ssub.s32 %s30, %s37
    %p65 = scmp.eq.s32.totalorder %s64, 0
    %s67 = sadd.s32 %s66, 1
    %s68 = scalar_select %p65, %s66, %s67
    %p71 = pneg %p65
    %p72 = scmp.eq.s32.totalorder %s30, 1
    %p73 = por %p71, %p72
    %p74 = scmp.ne.s32.totalorder %s66, %s69
    %p75 = scmp.eq.s32.totalorder %s30, 0
    %p76 = por %p74, %p75
    %p77 = scmp.ne.s32.totalorder %s66, %s69
    %p78 = scmp.eq.s32.totalorder %s35, 1
    %p79 = por %p77, %p78
    %p80 = scmp.ne.s32.totalorder %s69, %s70
    %p81 = scmp.eq.s32.totalorder %s35, 0
    %p82 = por %p80, %p81
    %p83 = scmp.ne.s32.totalorder %s69, %s70
    %p84 = scmp.eq.s32.totalorder %s36, 1
    %p85 = por %p83, %p84
    %p87 = scmp.ne.s32.totalorder %s70, %s86
    %p88 = scmp.eq.s32.totalorder %s36, 0
    %p89 = por %p87, %p88
    %s91 = sadd.s32 %s90, 1
    %p94 = scmp.eq.s32.totalorder %s30, 1
    %p95 = scmp.ne.s32.totalorder %s90, %s92
    %p96 = scmp.eq.s32.totalorder %s30, 0
    %p97 = por %p95, %p96
    %p98 = scmp.ne.s32.totalorder %s90, %s92
    %p99 = scmp.eq.s32.totalorder %s35, 1
    %p100 = por %p98, %p99
    %p101 = scmp.ne.s32.totalorder %s92, %s93
    %p102 = scmp.eq.s32.totalorder %s35, 0
    %p103 = por %p101, %p102
    %p104 = scmp.ne.s32.totalorder %s92, %s93
    %p105 = scmp.eq.s32.totalorder %s36, 1
    %p106 = por %p104, %p105
    %p108 = scmp.ne.s32.totalorder %s93, %s107
    %p109 = scmp.eq.s32.totalorder %s36, 0
    %p110 = por %p108, %p109
    %s112 = sadd.s32 %s111, 1
    %p115 = scmp.eq.s32.totalorder %s30, 1
    %p116 = scmp.ne.s32.totalorder %s111, %s113
    %p117 = scmp.eq.s32.totalorder %s30, 0
    %p118 = por %p116, %p117
    %p119 = scmp.ne.s32.totalorder %s111, %s113
    %p120 = scmp.eq.s32.totalorder %s35, 1
    %p121 = por %p119, %p120
    %p122 = scmp.ne.s32.totalorder %s113, %s114
    %p123 = scmp.eq.s32.totalorder %s35, 0
    %p124 = por %p122, %p123
    %p125 = scmp.ne.s32.totalorder %s113, %s114
    %p126 = scmp.eq.s32.totalorder %s36, 1
    %p127 = por %p125, %p126
    %p129 = scmp.ne.s32.totalorder %s114, %s128
    %p130 = scmp.eq.s32.totalorder %s36, 0
    %p131 = por %p129, %p130
    %s133 = sadd.s32 %s132, 1
    %p136 = scmp.eq.s32.totalorder %s30, 1
    %p137 = scmp.ne.s32.totalorder %s132, %s134
    %p138 = scmp.eq.s32.totalorder %s30, 0
    %p139 = por %p137, %p138
    %p140 = scmp.ne.s32.totalorder %s132, %s134
    %p141 = scmp.eq.s32.totalorder %s35, 1
    %p142 = por %p140, %p141
    %p143 = scmp.ne.s32.totalorder %s134, %s135
    %p144 = scmp.eq.s32.totalorder %s35, 0
    %p145 = por %p143, %p144
    %p146 = scmp.ne.s32.totalorder %s134, %s135
    %p147 = scmp.eq.s32.totalorder %s36, 1
    %p148 = por %p146, %p147
    %p150 = scmp.ne.s32.totalorder %s135, %s149
    %p151 = scmp.eq.s32.totalorder %s36, 0
    %p152 = por %p150, %p151
    %s154 = sadd.s32 %s153, 1
    %p157 = scmp.eq.s32.totalorder %s30, 1
    %p158 = scmp.ne.s32.totalorder %s153, %s155
    %p159 = scmp.eq.s32.totalorder %s30, 0
    %p160 = por %p158, %p159
    %p161 = scmp.ne.s32.totalorder %s153, %s155
    %p162 = scmp.eq.s32.totalorder %s35, 1
    %p163 = por %p161, %p162
    %p164 = scmp.ne.s32.totalorder %s155, %s156
    %p165 = scmp.eq.s32.totalorder %s35, 0
    %p166 = por %p164, %p165
    %p167 = scmp.ne.s32.totalorder %s155, %s156
    %p168 = scmp.eq.s32.totalorder %s36, 1
    %p169 = por %p167, %p168
    %p171 = scmp.ne.s32.totalorder %s156, %s170
    %p172 = scmp.eq.s32.totalorder %s36, 0
    %p173 = por %p171, %p172
    %s175 = sadd.s32 %s174, 1
    %p178 = scmp.eq.s32.totalorder %s30, 1
    %p179 = scmp.ne.s32.totalorder %s174, %s176
    %p180 = scmp.eq.s32.totalorder %s30, 0
    %p181 = por %p179, %p180
    %p182 = scmp.ne.s32.totalorder %s174, %s176
    %p183 = scmp.eq.s32.totalorder %s35, 1
    %p184 = por %p182, %p183
    %p185 = scmp.ne.s32.totalorder %s176, %s177
    %p186 = scmp.eq.s32.totalorder %s35, 0
    %p187 = por %p185, %p186
    %p188 = scmp.ne.s32.totalorder %s176, %s177
    %p189 = scmp.eq.s32.totalorder %s36, 1
    %p190 = por %p188, %p189
    %p192 = scmp.ne.s32.totalorder %s177, %s191
    %p193 = scmp.eq.s32.totalorder %s36, 0
    %p194 = por %p192, %p193
    %s196 = sadd.s32 %s195, 1
    %p199 = scmp.eq.s32.totalorder %s30, 1
    %p200 = scmp.ne.s32.totalorder %s195, %s197
    %p201 = scmp.eq.s32.totalorder %s30, 0
    %p202 = por %p200, %p201
    %p203 = scmp.ne.s32.totalorder %s195, %s197
    %p204 = scmp.eq.s32.totalorder %s35, 1
    %p205 = por %p203, %p204
    %p206 = scmp.ne.s32.totalorder %s197, %s198
    %p207 = scmp.eq.s32.totalorder %s35, 0
    %p208 = por %p206, %p207
    %p209 = scmp.ne.s32.totalorder %s197, %s198
    %p210 = scmp.eq.s32.totalorder %s36, 1
    %p211 = por %p209, %p210
    %p213 = scmp.ne.s32.totalorder %s198, %s212
    %p214 = scmp.eq.s32.totalorder %s36, 0
    %p215 = por %p213, %p214
    %s217 = sadd.s32 %s216, 1
    %p220 = scmp.eq.s32.totalorder %s30, 1
    %p221 = scmp.ne.s32.totalorder %s216, %s218
    %p222 = scmp.eq.s32.totalorder %s30, 0
    %p223 = por %p221, %p222
    %p224 = scmp.ne.s32.totalorder %s216, %s218
    %p225 = scmp.eq.s32.totalorder %s35, 1
    %p226 = por %p224, %p225
    %p227 = scmp.ne.s32.totalorder %s218, %s219
    %p228 = scmp.eq.s32.totalorder %s35, 0
    %p229 = por %p227, %p228
    %p230 = scmp.ne.s32.totalorder %s218, %s219
    %p231 = scmp.eq.s32.totalorder %s36, 1
    %p232 = por %p230, %p231
    %p234 = scmp.ne.s32.totalorder %s219, %s233
    %p235 = scmp.eq.s32.totalorder %s36, 0
    %p236 = por %p234, %p235
    %s238 = sadd.s32 %s237, 1
    %p241 = scmp.eq.s32.totalorder %s30, 1
    %p242 = scmp.ne.s32.totalorder %s237, %s239
    %p243 = scmp.eq.s32.totalorder %s30, 0
    %p244 = por %p242, %p243
    %p245 = scmp.ne.s32.totalorder %s237, %s239
    %p246 = scmp.eq.s32.totalorder %s35, 1
    %p247 = por %p245, %p246
    %p248 = scmp.ne.s32.totalorder %s239, %s240
    %p249 = scmp.eq.s32.totalorder %s35, 0
    %p250 = por %p248, %p249
    %p251 = scmp.ne.s32.totalorder %s239, %s240
    %p252 = scmp.eq.s32.totalorder %s36, 1
    %p253 = por %p251, %p252
    %p255 = scmp.ne.s32.totalorder %s240, %s254
    %p256 = scmp.eq.s32.totalorder %s36, 0
    %p257 = por %p255, %p256
    %s259 = sadd.s32 %s258, 1
    %p262 = scmp.eq.s32.totalorder %s30, 1
    %p263 = scmp.ne.s32.totalorder %s258, %s260
    %p264 = scmp.eq.s32.totalorder %s30, 0
    %p265 = por %p263, %p264
    %p266 = scmp.ne.s32.totalorder %s258, %s260
    %p267 = scmp.eq.s32.totalorder %s35, 1
    %p268 = por %p266, %p267
    %p269 = scmp.ne.s32.totalorder %s260, %s261
    %p270 = scmp.eq.s32.totalorder %s35, 0
    %p271 = por %p269, %p270
    %p272 = scmp.ne.s32.totalorder %s260, %s261
    %p273 = scmp.eq.s32.totalorder %s36, 1
    %p274 = por %p272, %p273
    %p276 = scmp.ne.s32.totalorder %s261, %s275
    %p277 = scmp.eq.s32.totalorder %s36, 0
    %p278 = por %p276, %p277
    %s280 = sadd.s32 %s279, 1
    %p283 = scmp.eq.s32.totalorder %s30, 1
    %p284 = scmp.ne.s32.totalorder %s279, %s281
    %p285 = scmp.eq.s32.totalorder %s30, 0
    %p286 = por %p284, %p285
    %p287 = scmp.ne.s32.totalorder %s279, %s281
    %p288 = scmp.eq.s32.totalorder %s35, 1
    %p289 = por %p287, %p288
    %p290 = scmp.ne.s32.totalorder %s281, %s282
    %p291 = scmp.eq.s32.totalorder %s35, 0
    %p292 = por %p290, %p291
    %p293 = scmp.ne.s32.totalorder %s281, %s282
    %p294 = scmp.eq.s32.totalorder %s36, 1
    %p295 = por %p293, %p294
    %p297 = scmp.ne.s32.totalorder %s282, %s296
    %p298 = scmp.eq.s32.totalorder %s36, 0
    %p299 = por %p297, %p298
    %s301 = sadd.s32 %s300, 1
    %p304 = scmp.eq.s32.totalorder %s30, 1
    %p305 = scmp.ne.s32.totalorder %s300, %s302
    %p306 = scmp.eq.s32.totalorder %s30, 0
    %p307 = por %p305, %p306
    %p308 = scmp.ne.s32.totalorder %s300, %s302
    %p309 = scmp.eq.s32.totalorder %s35, 1
    %p310 = por %p308, %p309
    %p311 = scmp.ne.s32.totalorder %s302, %s303
    %p312 = scmp.eq.s32.totalorder %s35, 0
    %p313 = por %p311, %p312
    %p314 = scmp.ne.s32.totalorder %s302, %s303
    %p315 = scmp.eq.s32.totalorder %s36, 1
    %p316 = por %p314, %p315
    %p318 = scmp.ne.s32.totalorder %s303, %s317
    %p319 = scmp.eq.s32.totalorder %s36, 0
    %p320 = por %p318, %p319
    %s322 = sadd.s32 %s321, 1
    %p325 = scmp.eq.s32.totalorder %s30, 1
    %p326 = scmp.ne.s32.totalorder %s321, %s323
    %p327 = scmp.eq.s32.totalorder %s30, 0
    %p328 = por %p326, %p327
    %p329 = scmp.ne.s32.totalorder %s321, %s323
    %p330 = scmp.eq.s32.totalorder %s35, 1
    %p331 = por %p329, %p330
    %p332 = scmp.ne.s32.totalorder %s323, %s324
    %p333 = scmp.eq.s32.totalorder %s35, 0
    %p334 = por %p332, %p333
    %p335 = scmp.ne.s32.totalorder %s323, %s324
    %p336 = scmp.eq.s32.totalorder %s36, 1
    %p337 = por %p335, %p336
    %p339 = scmp.ne.s32.totalorder %s324, %s338
    %p340 = scmp.eq.s32.totalorder %s36, 0
    %p341 = por %p339, %p340
    %s343 = sadd.s32 %s342, 1
    %p346 = scmp.eq.s32.totalorder %s30, 1
    %p347 = scmp.ne.s32.totalorder %s342, %s344
    %p348 = scmp.eq.s32.totalorder %s30, 0
    %p349 = por %p347, %p348
    %p350 = scmp.ne.s32.totalorder %s342, %s344
    %p351 = scmp.eq.s32.totalorder %s35, 1
    %p352 = por %p350, %p351
    %p353 = scmp.ne.s32.totalorder %s344, %s345
    %p354 = scmp.eq.s32.totalorder %s35, 0
    %p355 = por %p353, %p354
    %p356 = scmp.ne.s32.totalorder %s344, %s345
    %p357 = scmp.eq.s32.totalorder %s36, 1
    %p358 = por %p356, %p357
    %p360 = scmp.ne.s32.totalorder %s345, %s359
    %p361 = scmp.eq.s32.totalorder %s36, 0
    %p362 = por %p360, %p361
    %s364 = sadd.s32 %s363, 1
    %p367 = scmp.eq.s32.totalorder %s30, 1
    %p368 = scmp.ne.s32.totalorder %s363, %s365
    %p369 = scmp.eq.s32.totalorder %s30, 0
    %p370 = por %p368, %p369
    %p371 = scmp.ne.s32.totalorder %s363, %s365
    %p372 = scmp.eq.s32.totalorder %s35, 1
    %p373 = por %p371, %p372
    %p374 = scmp.ne.s32.totalorder %s365, %s366
    %p375 = scmp.eq.s32.totalorder %s35, 0
    %p376 = por %p374, %p375
    %p377 = scmp.ne.s32.totalorder %s365, %s366
    %p378 = scmp.eq.s32.totalorder %s36, 1
    %p379 = por %p377, %p378
    %p381 = scmp.ne.s32.totalorder %s366, %s380
    %p382 = scmp.eq.s32.totalorder %s36, 0
    %p383 = por %p381, %p382
    %s385 = sadd.s32 %s384, 1
    %p388 = scmp.eq.s32.totalorder %s30, 1
    %p389 = scmp.ne.s32.totalorder %s384, %s386
    %p390 = scmp.eq.s32.totalorder %s30, 0
    %p391 = por %p389, %p390
    %p392 = scmp.ne.s32.totalorder %s384, %s386
    %p393 = scmp.eq.s32.totalorder %s35, 1
    %p394 = por %p392, %p393
    %p395 = scmp.ne.s32.totalorder %s386, %s387
    %p396 = scmp.eq.s32.totalorder %s35, 0
    %p397 = por %p395, %p396
    %p398 = scmp.ne.s32.totalorder %s386, %s387
    %p399 = scmp.eq.s32.totalorder %s36, 1
    %p400 = por %p398, %p399
    %p402 = scmp.ne.s32.totalorder %s387, %s401
    %p403 = scmp.eq.s32.totalorder %s36, 0
    %p404 = por %p402, %p403
    %s406 = sadd.s32 %s405, 1
    %p409 = scmp.eq.s32.totalorder %s30, 1
    %p410 = scmp.ne.s32.totalorder %s405, %s407
    %p411 = scmp.eq.s32.totalorder %s30, 0
    %p412 = por %p410, %p411
    %p413 = scmp.ne.s32.totalorder %s405, %s407
    %p414 = scmp.eq.s32.totalorder %s35, 1
    %p415 = por %p413, %p414
    %p416 = scmp.ne.s32.totalorder %s407, %s408
    %p417 = scmp.eq.s32.totalorder %s35, 0
    %p418 = por %p416, %p417
    %p419 = scmp.ne.s32.totalorder %s407, %s408
    %p420 = scmp.eq.s32.totalorder %s36, 1
    %p421 = por %p419, %p420
    %p423 = scmp.ne.s32.totalorder %s408, %s422
    %p424 = scmp.eq.s32.totalorder %s36, 0
    %p425 = por %p423, %p424
    %s427 = sadd.s32 %s426, 1
    %p430 = scmp.eq.s32.totalorder %s30, 1
    %p431 = scmp.ne.s32.totalorder %s426, %s428
    %p432 = scmp.eq.s32.totalorder %s30, 0
    %p433 = por %p431, %p432
    %p434 = scmp.ne.s32.totalorder %s426, %s428
    %p435 = scmp.eq.s32.totalorder %s35, 1
    %p436 = por %p434, %p435
    %p437 = scmp.ne.s32.totalorder %s428, %s429
    %p438 = scmp.eq.s32.totalorder %s35, 0
    %p439 = por %p437, %p438
    %p440 = scmp.ne.s32.totalorder %s428, %s429
    %p441 = scmp.eq.s32.totalorder %s36, 1
    %p442 = por %p440, %p441
    %p444 = scmp.ne.s32.totalorder %s429, %s443
    %p445 = scmp.eq.s32.totalorder %s36, 0
    %p446 = por %p444, %p445
    %s448 = sadd.s32 %s447, 1
    %p451 = scmp.eq.s32.totalorder %s30, 1
    %p452 = scmp.ne.s32.totalorder %s447, %s449
    %p453 = scmp.eq.s32.totalorder %s30, 0
    %p454 = por %p452, %p453
    %p455 = scmp.ne.s32.totalorder %s447, %s449
    %p456 = scmp.eq.s32.totalorder %s35, 1
    %p457 = por %p455, %p456
    %p458 = scmp.ne.s32.totalorder %s449, %s450
    %p459 = scmp.eq.s32.totalorder %s35, 0
    %p460 = por %p458, %p459
    %p461 = scmp.ne.s32.totalorder %s449, %s450
    %p462 = scmp.eq.s32.totalorder %s36, 1
    %p463 = por %p461, %p462
    %p465 = scmp.ne.s32.totalorder %s450, %s464
    %p466 = scmp.eq.s32.totalorder %s36, 0
    %p467 = por %p465, %p466
    %s469 = sadd.s32 %s468, 1
    %p472 = scmp.eq.s32.totalorder %s30, 1
    %p473 = scmp.ne.s32.totalorder %s468, %s470
    %p474 = scmp.eq.s32.totalorder %s30, 0
    %p475 = por %p473, %p474
    %p476 = scmp.ne.s32.totalorder %s468, %s470
    %p477 = scmp.eq.s32.totalorder %s35, 1
    %p478 = por %p476, %p477
    %p479 = scmp.ne.s32.totalorder %s470, %s471
    %p480 = scmp.eq.s32.totalorder %s35, 0
    %p481 = por %p479, %p480
    %p482 = scmp.ne.s32.totalorder %s470, %s471
    %p483 = scmp.eq.s32.totalorder %s36, 1
    %p484 = por %p482, %p483
    %p486 = scmp.ne.s32.totalorder %s471, %s485
    %p487 = scmp.eq.s32.totalorder %s36, 0
    %p488 = por %p486, %p487
    %s490 = sadd.s32 %s489, 1
    %p493 = scmp.eq.s32.totalorder %s30, 1
    %p494 = scmp.ne.s32.totalorder %s489, %s491
    %p495 = scmp.eq.s32.totalorder %s30, 0
    %p496 = por %p494, %p495
    %p497 = scmp.ne.s32.totalorder %s489, %s491
    %p498 = scmp.eq.s32.totalorder %s35, 1
    %p499 = por %p497, %p498
    %p500 = scmp.ne.s32.totalorder %s491, %s492
    %p501 = scmp.eq.s32.totalorder %s35, 0
    %p502 = por %p500, %p501
    %p503 = scmp.ne.s32.totalorder %s491, %s492
    %p504 = scmp.eq.s32.totalorder %s36, 1
    %p505 = por %p503, %p504
    %p507 = scmp.ne.s32.totalorder %s492, %s506
    %p508 = scmp.eq.s32.totalorder %s36, 0
    %p509 = por %p507, %p508
    %s510 = ssub.s32 %s30, %s37
    %p511 = scmp.eq.s32.totalorder %s510, 0
    %s513 = sadd.s32 %s512, 1
    %s514 = scalar_select %p511, %s512, %s513
    %p517 = pneg %p511
    %p518 = scmp.eq.s32.totalorder %s30, 1
    %p519 = por %p517, %p518
    %p520 = scmp.ne.s32.totalorder %s512, %s515
    %p521 = scmp.eq.s32.totalorder %s30, 0
    %p522 = por %p520, %p521
    %p523 = scmp.ne.s32.totalorder %s512, %s515
    %p524 = scmp.eq.s32.totalorder %s35, 1
    %p525 = por %p523, %p524
    %p526 = scmp.ne.s32.totalorder %s515, %s516
    %p527 = scmp.eq.s32.totalorder %s35, 0
    %p528 = por %p526, %p527
    %p529 = scmp.ne.s32.totalorder %s515, %s516
    %p530 = scmp.eq.s32.totalorder %s36, 1
    %p531 = por %p529, %p530
    %p533 = scmp.ne.s32.totalorder %s516, %s532
    %p534 = scmp.eq.s32.totalorder %s36, 0
    %p535 = por %p533, %p534
    %s536 = ssub.s32 %s30, %s37
    %p537 = scmp.eq.s32.totalorder %s536, 0
    %s539 = sadd.s32 %s538, 1
    %s540 = scalar_select %p537, %s538, %s539
    %p543 = pneg %p537
    %p544 = scmp.eq.s32.totalorder %s30, 1
    %p545 = por %p543, %p544
    %p546 = scmp.ne.s32.totalorder %s538, %s541
    %p547 = scmp.eq.s32.totalorder %s30, 0
    %p548 = por %p546, %p547
    %p549 = scmp.ne.s32.totalorder %s538, %s541
    %p550 = scmp.eq.s32.totalorder %s35, 1
    %p551 = por %p549, %p550
    %p552 = scmp.ne.s32.totalorder %s541, %s542
    %p553 = scmp.eq.s32.totalorder %s35, 0
    %p554 = por %p552, %p553
    %p555 = scmp.ne.s32.totalorder %s541, %s542
    %p556 = scmp.eq.s32.totalorder %s36, 1
    %p557 = por %p555, %p556
    %p559 = scmp.ne.s32.totalorder %s542, %s558
    %p560 = scmp.eq.s32.totalorder %s36, 0
    %p561 = por %p559, %p560
    %p562 = scmp.le.s32.totalorder 1, %s30
    %p563 = scmp.lt.s32.totalorder %s30, 3
    %p564 = pnand %p562, %p563
    %p565 = pneg %p564
    // Predicated region
    $region9: #{gnn_energy_model_forward.1} parent=5 // pred_check
      _
    $region10: #{gnn_energy_model_forward.1} parent=5 // pred_check_branch
      %567 = sbr.rel (%p564) target = $region12
    $region11: #{gnn_energy_model_forward.1} parent=5 // pred_region
      %s568 = ssub.s32 %s30, 1
      // Predicated region
      $region13: #{gnn_energy_model_forward.1} parent=11 // pred_check
        %p569 = pneg %p103
      $region14: #{gnn_energy_model_forward.1} parent=11 // pred_check_branch
        %571 = sbr.rel (%p569) target = $region16
      $region15: #{gnn_energy_model_forward.1} parent=11 // pred_region
        _
      $region16: #{gnn_energy_model_forward.1} parent=11 // pred_fallthru
        _
      // Predicated region
      $region17: #{gnn_energy_model_forward.1} parent=11 // pred_check
        %p572 = pneg %p124
      $region18: #{gnn_energy_model_forward.1} parent=11 // pred_check_branch
        %574 = sbr.rel (%p572) target = $region20
      $region19: #{gnn_energy_model_forward.1} parent=11 // pred_region
        _
      $region20: #{gnn_energy_model_forward.1} parent=11 // pred_fallthru
        _
      // Predicated region
      $region21: #{gnn_energy_model_forward.1} parent=11 // pred_check
        %p575 = pneg %p145
      $region22: #{gnn_energy_model_forward.1} parent=11 // pred_check_branch
        %577 = sbr.rel (%p575) target = $region24
      $region23: #{gnn_energy_model_forward.1} parent=11 // pred_region
        _
      $region24: #{gnn_energy_model_forward.1} parent=11 // pred_fallthru
        _
      // Predicated region
      $region25: #{gnn_energy_model_forward.1} parent=11 // pred_check
        %p578 = pneg %p166
      $region26: #{gnn_energy_model_forward.1} parent=11 // pred_check_branch
        %580 = sbr.rel (%p578) target = $region28
      $region27: #{gnn_energy_model_forward.1} parent=11 // pred_region
        _
      $region28: #{gnn_energy_model_forward.1} parent=11 // pred_fallthru
        _
      // Predicated region
      $region29: #{gnn_energy_model_forward.1} parent=11 // pred_check
        %p581 = pneg %p187
      $region30: #{gnn_energy_model_forward.1} parent=11 // pred_check_branch
        %583 = sbr.rel (%p581) target = $region32
      $region31: #{gnn_energy_model_forward.1} parent=11 // pred_region
        _
      $region32: #{gnn_energy_model_forward.1} parent=11 // pred_fallthru
        _
      // Predicated region
      $region33: #{gnn_energy_model_forward.1} parent=11 // pred_check
        %p584 = pneg %p208
      $region34: #{gnn_energy_model_forward.1} parent=11 // pred_check_branch
        %586 = sbr.rel (%p584) target = $region36
      $region35: #{gnn_energy_model_forward.1} parent=11 // pred_region
        _
      $region36: #{gnn_energy_model_forward.1} parent=11 // pred_fallthru
        _
      // Predicated region
      $region37: #{gnn_energy_model_forward.1} parent=11 // pred_check
        %p587 = pneg %p229
      $region38: #{gnn_energy_model_forward.1} parent=11 // pred_check_branch
        %589 = sbr.rel (%p587) target = $region40
      $region39: #{gnn_energy_model_forward.1} parent=11 // pred_region
        _
      $region40: #{gnn_energy_model_forward.1} parent=11 // pred_fallthru
        _
      // Predicated region
      $region41: #{gnn_energy_model_forward.1} parent=11 // pred_check
        %p590 = pneg %p250
      $region42: #{gnn_energy_model_forward.1} parent=11 // pred_check_branch
        %592 = sbr.rel (%p590) target = $region44
      $region43: #{gnn_energy_model_forward.1} parent=11 // pred_region
        _
      $region44: #{gnn_energy_model_forward.1} parent=11 // pred_fallthru
        _
      // Predicated region
      $region45: #{gnn_energy_model_forward.1} parent=11 // pred_check
        %p593 = pneg %p271
      $region46: #{gnn_energy_model_forward.1} parent=11 // pred_check_branch
        %595 = sbr.rel (%p593) target = $region48
      $region47: #{gnn_energy_model_forward.1} parent=11 // pred_region
        _
      $region48: #{gnn_energy_model_forward.1} parent=11 // pred_fallthru
        _
      // Predicated region
      $region49: #{gnn_energy_model_forward.1} parent=11 // pred_check
        %p596 = pneg %p292
      $region50: #{gnn_energy_model_forward.1} parent=11 // pred_check_branch
        %598 = sbr.rel (%p596) target = $region52
      $region51: #{gnn_energy_model_forward.1} parent=11 // pred_region
        _
      $region52: #{gnn_energy_model_forward.1} parent=11 // pred_fallthru
        _
      // Predicated region
      $region53: #{gnn_energy_model_forward.1} parent=11 // pred_check
        %p599 = pneg %p313
      $region54: #{gnn_energy_model_forward.1} parent=11 // pred_check_branch
        %601 = sbr.rel (%p599) target = $region56
      $region55: #{gnn_energy_model_forward.1} parent=11 // pred_region
        _
      $region56: #{gnn_energy_model_forward.1} parent=11 // pred_fallthru
        _
      // Predicated region
      $region57: #{gnn_energy_model_forward.1} parent=11 // pred_check
        %p602 = pneg %p334
      $region58: #{gnn_energy_model_forward.1} parent=11 // pred_check_branch
        %604 = sbr.rel (%p602) target = $region60
      $region59: #{gnn_energy_model_forward.1} parent=11 // pred_region
        _
      $region60: #{gnn_energy_model_forward.1} parent=11 // pred_fallthru
        _
      // Predicated region
      $region61: #{gnn_energy_model_forward.1} parent=11 // pred_check
        %p605 = pneg %p355
      $region62: #{gnn_energy_model_forward.1} parent=11 // pred_check_branch
        %607 = sbr.rel (%p605) target = $region64
      $region63: #{gnn_energy_model_forward.1} parent=11 // pred_region
        _
      $region64: #{gnn_energy_model_forward.1} parent=11 // pred_fallthru
        _
      // Predicated region
      $region65: #{gnn_energy_model_forward.1} parent=11 // pred_check
        %p608 = pneg %p376
      $region66: #{gnn_energy_model_forward.1} parent=11 // pred_check_branch
        %610 = sbr.rel (%p608) target = $region68
      $region67: #{gnn_energy_model_forward.1} parent=11 // pred_region
        _
      $region68: #{gnn_energy_model_forward.1} parent=11 // pred_fallthru
        _
      // Predicated region
      $region69: #{gnn_energy_model_forward.1} parent=11 // pred_check
        %p611 = pneg %p397
      $region70: #{gnn_energy_model_forward.1} parent=11 // pred_check_branch
        %613 = sbr.rel (%p611) target = $region72
      $region71: #{gnn_energy_model_forward.1} parent=11 // pred_region
        _
      $region72: #{gnn_energy_model_forward.1} parent=11 // pred_fallthru
        _
      // Predicated region
      $region73: #{gnn_energy_model_forward.1} parent=11 // pred_check
        %p614 = pneg %p418
      $region74: #{gnn_energy_model_forward.1} parent=11 // pred_check_branch
        %616 = sbr.rel (%p614) target = $region76
      $region75: #{gnn_energy_model_forward.1} parent=11 // pred_region
        _
      $region76: #{gnn_energy_model_forward.1} parent=11 // pred_fallthru
        _
      // Predicated region
      $region77: #{gnn_energy_model_forward.1} parent=11 // pred_check
        %p617 = pneg %p439
      $region78: #{gnn_energy_model_forward.1} parent=11 // pred_check_branch
        %619 = sbr.rel (%p617) target = $region80
      $region79: #{gnn_energy_model_forward.1} parent=11 // pred_region
        _
      $region80: #{gnn_energy_model_forward.1} parent=11 // pred_fallthru
        _
      // Predicated region
      $region81: #{gnn_energy_model_forward.1} parent=11 // pred_check
        %p620 = pneg %p460
      $region82: #{gnn_energy_model_forward.1} parent=11 // pred_check_branch
        %622 = sbr.rel (%p620) target = $region84
      $region83: #{gnn_energy_model_forward.1} parent=11 // pred_region
        _
      $region84: #{gnn_energy_model_forward.1} parent=11 // pred_fallthru
        _
      // Predicated region
      $region85: #{gnn_energy_model_forward.1} parent=11 // pred_check
        %p623 = pneg %p481
      $region86: #{gnn_energy_model_forward.1} parent=11 // pred_check_branch
        %625 = sbr.rel (%p623) target = $region88
      $region87: #{gnn_energy_model_forward.1} parent=11 // pred_region
        _
      $region88: #{gnn_energy_model_forward.1} parent=11 // pred_fallthru
        _
      // Predicated region
      $region89: #{gnn_energy_model_forward.1} parent=11 // pred_check
        %p626 = pneg %p502
      $region90: #{gnn_energy_model_forward.1} parent=11 // pred_check_branch
        %628 = sbr.rel (%p626) target = $region92
      $region91: #{gnn_energy_model_forward.1} parent=11 // pred_region
        _
      $region92: #{gnn_energy_model_forward.1} parent=11 // pred_fallthru
        _
    $region12: #{gnn_energy_model_forward.1} parent=5 // pred_fallthru
      _
    %p629 = scmp.lt.s32.totalorder %s30, 2
    // Predicated region
    $region93: #{gnn_energy_model_forward.1} parent=5 // pred_check
      %p630 = pneg %p629
    $region94: #{gnn_energy_model_forward.1} parent=5 // pred_check_branch
      %632 = sbr.rel (%p630) target = $region96
    $region95: #{gnn_energy_model_forward.1} parent=5 // pred_region
      // Predicated region
      $region97: #{gnn_energy_model_forward.1} parent=95 // pred_check
        %p633 = pneg %p50
      $region98: #{gnn_energy_model_forward.1} parent=95 // pred_check_branch
        %635 = sbr.rel (%p633) target = $region100
      $region99: #{gnn_energy_model_forward.1} parent=95 // pred_region
        %p636 = scmp.lt.s32.totalorder %s30, 1
        %s637 = scalar_select %p636, %s30, 1
        %s638 = smul.addr %s637, 4
        %s639 = scalar_lea.vmem %s0, %s638
      $region100: #{gnn_energy_model_forward.1} parent=95 // pred_fallthru
        _
      // Predicated region
      $region101: #{gnn_energy_model_forward.1} parent=95 // pred_check
        %p640 = pneg %p76
      $region102: #{gnn_energy_model_forward.1} parent=95 // pred_check_branch
        %642 = sbr.rel (%p640) target = $region104
      $region103: #{gnn_energy_model_forward.1} parent=95 // pred_region
        %p643 = scmp.lt.s32.totalorder %s30, 1
        %s644 = scalar_select %p643, %s30, 1
        %s645 = smul.addr %s644, 2
        %s646 = smul.addr %s645, 4
        %s647 = scalar_lea.vmem %s1, %s646
      $region104: #{gnn_energy_model_forward.1} parent=95 // pred_fallthru
        _
    $region96: #{gnn_energy_model_forward.1} parent=5 // pred_fallthru
      _
    %p648 = scmp.le.s32.totalorder 1, %s30
    %p649 = scmp.lt.s32.totalorder %s30, 3
    %p650 = pnand %p648, %p649
    %p651 = pneg %p650
    // Predicated region
    $region105: #{gnn_energy_model_forward.1} parent=5 // pred_check
      _
    $region106: #{gnn_energy_model_forward.1} parent=5 // pred_check_branch
      %653 = sbr.rel (%p650) target = $region108
    $region107: #{gnn_energy_model_forward.1} parent=5 // pred_region
      %s654 = ssub.s32 %s30, 1
      %p655 = scmp.lt.s32.totalorder %s35, 1
      %s656 = scalar_select %p655, %s35, 1
      %s657 = smul.addr %s656, 4
      %s658 = scalar_lea.vmem %s0, %s657
      %p659 = pneg %p56
      %p660 = pneg %p53
      %p661 = scmp.lt.s32.totalorder %s35, 1
      %s662 = scalar_select %p661, %s35, 1
      %s663 = smul.addr %s662, 2
      %s664 = smul.addr %s663, 4
      %s665 = scalar_lea.vmem %s1, %s664
      %p666 = pneg %p82
      %p667 = pneg %p79
      %p668 = pneg %p103
      %p669 = pneg %p100
      %p670 = pneg %p124
      %p671 = pneg %p121
      %p672 = pneg %p145
      %p673 = pneg %p142
      %p674 = pneg %p166
      %p675 = pneg %p163
      %p676 = pneg %p187
      %p677 = pneg %p184
      %p678 = pneg %p208
      %p679 = pneg %p205
      %p680 = pneg %p229
      %p681 = pneg %p226
      %p682 = pneg %p250
      %p683 = pneg %p247
      %p684 = pneg %p271
      %p685 = pneg %p268
      %p686 = pneg %p292
      %p687 = pneg %p289
      %p688 = pneg %p313
      %p689 = pneg %p310
      %p690 = pneg %p334
      %p691 = pneg %p331
      %p692 = pneg %p355
      %p693 = pneg %p352
      %p694 = pneg %p376
      %p695 = pneg %p373
      %p696 = pneg %p397
      %p697 = pneg %p394
      %p698 = pneg %p418
      %p699 = pneg %p415
      %p700 = pneg %p439
      %p701 = pneg %p436
      %p702 = pneg %p460
      %p703 = pneg %p457
      %p704 = pneg %p481
      %p705 = pneg %p478
      %p706 = pneg %p502
      %p707 = pneg %p499
      %p708 = pneg %p528
      %p709 = pneg %p525
      %p710 = scmp.lt.s32.totalorder %s35, 1
      %s711 = scalar_select %p710, %s35, 1
      %s712 = smul.addr %s711, 8
      %s713 = scalar_lea.vmem %s22, %s712
      %p714 = pneg %p554
      %p715 = pneg %p551
      %p716 = scmp.lt.s32.totalorder %s35, 1
      %s717 = scalar_select %p716, %s35, 1
      %s718 = smul.addr %s717, 2
      %s719 = smul.addr %s718, 8
      %s720 = scalar_lea.vmem %s23, %s719
      %p721 = scmp.lt.s32.totalorder %s35, 1
      %s722 = scalar_select %p721, %s35, 1
      %s723 = smul.addr %s722, 4
      %s724 = scalar_lea.vmem %s0, %s723
      %p725 = scmp.lt.s32.totalorder %s35, 1
      %s726 = scalar_select %p725, %s35, 1
      %s727 = smul.addr %s726, 2
      %s728 = smul.addr %s727, 4
      %s729 = scalar_lea.vmem %s1, %s728
      %p730 = scmp.lt.s32.totalorder %s35, 1
      %s731 = scalar_select %p730, %s35, 1
      %s732 = smul.addr %s731, 8
      %s733 = scalar_lea.vmem %s22, %s732
      %p734 = scmp.lt.s32.totalorder %s35, 1
      %s735 = scalar_select %p734, %s35, 1
      %s736 = smul.addr %s735, 2
      %s737 = smul.addr %s736, 8
      %s738 = scalar_lea.vmem %s23, %s737
      %v740 = vld [vmem:[%s724] sm:$0xf]
      %v741 = vld [vmem:[%s729] sm:$0xf]
      %v742 = vld [vmem:[%s729 + $0x4] sm:$0x3]
      %v743 = vld [vmem:[%s2] sm:$0xf]
      %v744 = vld [vmem:[%s3] sm:$0xf]
      %v745 = vld [vmem:[%s3 + $0x4] sm:$0x3]
      %v748 = vunpack.c.l.b16 %v741
      %v749 = vunpack.c.l.b16 %v742
      %v750 = vpack.c.b16 %v749, %v748
      %vm751 = vcmask 97280
      %v753 = vsel %vm751, %v743, 0
      %vm755 = vcmask 1045504
      %v757 = vsel %vm755, %v750, 0
      %759 = vmatprep.subr.bf16.mxu0 0
      %760 = vmatpush1.bf16.msra.mxu0 %v757
      %761 = vmatprep.subr.bf16.mxu0 0
      %762 = vmatpush1.bf16.msra.mxu0 0
      %763 = vmatprep.subr.bf16.mxu0 0
      %764 = vmatpush1.bf16.msra.mxu0 0
      %765 = vmatprep.subr.bf16.mxu0 0
      %766 = vmatpush1.bf16.msra.mxu0 0
      %767 = vmatprep.subr.bf16.mxu0 0
      %768 = vmatpush1.bf16.msra.mxu0 0
      %769 = vmatprep.subr.bf16.mxu0 0
      %770 = vmatpush1.bf16.msra.mxu0 0
      %771 = vmatprep.subr.bf16.mxu0 0
      %772 = vmatpush1.bf16.msra.mxu0 0
      %773 = vmatprep.subr.bf16.mxu0 0
      %774 = vmatpush1.bf16.msra.mxu0 0
      %775 = vmatprep.subr.bf16.mxu0 0
      %776 = vmatpush1.bf16.msra.mxu0 0
      %777 = vmatprep.subr.bf16.mxu0 0
      %778 = vmatpush1.bf16.msra.mxu0 0
      %779 = vmatprep.subr.bf16.mxu0 0
      %780 = vmatpush1.bf16.msra.mxu0 0
      %781 = vmatprep.subr.bf16.mxu0 0
      %782 = vmatpush1.bf16.msra.mxu0 0
      %783 = vmatprep.subr.bf16.mxu0 0
      %784 = vmatpush1.bf16.msra.mxu0 0
      %785 = vmatprep.subr.bf16.mxu0 0
      %786 = vmatpush1.bf16.msra.mxu0 0
      %787 = vmatprep.subr.bf16.mxu0 0
      %788 = vmatpush1.bf16.msra.mxu0 0
      %789 = vmatprep.subr.bf16.mxu0 0
      %790 = vmatpush1.bf16.msra.mxu0 0
      %791 = vmatprep.mubr.bf16.mxu0 0
      %792 = vmatmul.mubr.bf16.gmra.mrb[0].mxu0 %v753
      %v793 = vpop.f32.mrb[0].mxu0
      %v794 = vadd.f32 0.0, %v793
      %v795 = vpop.f32.mrb[0].mxu0
      %v796 = vpop.f32.mrb[0].mxu0
      %v797 = vpop.f32.mrb[0].mxu0
      %798 = vdwg.mxu0
      %v799 = vpack.c.bf16 %v794, %v794
      %v800 = vld [vmem:[%s4] sm:$0xf]
      %v801 = vld [vmem:[%s4 + $0x4] sm:$0xf]
      %v802 = vld [vmem:[%s4 + $0x8] sm:$0xf]
      %v803 = vld [vmem:[%s4 + $0xc] sm:$0xf]
      %v804 = vld [vmem:[%s4 + $0x10] sm:$0xf]
      %v805 = vld [vmem:[%s4 + $0x14] sm:$0xf]
      %v806 = vld [vmem:[%s4 + $0x18] sm:$0xf]
      %v807 = vld [vmem:[%s4 + $0x1c] sm:$0xf]
      %v808 = vld [vmem:[%s4 + $0x20] sm:$0xf]
      %v809 = vld [vmem:[%s4 + $0x24] sm:$0xf]
      %v810 = vld [vmem:[%s4 + $0x28] sm:$0xf]
      %v811 = vld [vmem:[%s4 + $0x2c] sm:$0xf]
      %v812 = vld [vmem:[%s4 + $0x30] sm:$0xf]
      %v813 = vld [vmem:[%s4 + $0x34] sm:$0xf]
      %v814 = vld [vmem:[%s4 + $0x38] sm:$0xf]
      %v815 = vld [vmem:[%s4 + $0x3c] sm:$0xf]
      %v816 = vld [vmem:[%s4 + $0x40] sm:$0xf]
      %v817 = vld [vmem:[%s4 + $0x44] sm:$0xf]
      %v818 = vld [vmem:[%s4 + $0x48] sm:$0xf]
      %v819 = vld [vmem:[%s4 + $0x4c] sm:$0xf]
      %v820 = vld [vmem:[%s4 + $0x50] sm:$0xf]
      %v821 = vld [vmem:[%s4 + $0x54] sm:$0xf]
      %v822 = vld [vmem:[%s4 + $0x58] sm:$0xf]
      %v823 = vld [vmem:[%s4 + $0x5c] sm:$0xf]
      %v824 = vld [vmem:[%s5] sm:$0x1]
      %v826 = vlaneseq
      %v827 = vshrl.u32 %v826, 7
      %v828 = vsub.s32 0, %v827
      %v829 = vrot.slane %v824, %v828
      %v855 = vunpack.c.l.b16 %v800
      %v856 = vunpack.c.l.b16 %v801
      %v857 = vunpack.c.l.b16 %v802
      %v858 = vunpack.c.l.b16 %v803
      %v859 = vunpack.c.l.b16 %v804
      %v860 = vunpack.c.l.b16 %v805
      %v861 = vunpack.c.l.b16 %v806
      %v862 = vunpack.c.l.b16 %v807
      %v863 = vunpack.c.l.b16 %v808
      %v864 = vunpack.c.l.b16 %v809
      %v865 = vunpack.c.l.b16 %v810
      %v866 = vunpack.c.l.b16 %v811
      %v867 = vunpack.c.l.b16 %v812
      %v868 = vunpack.c.l.b16 %v813
      %v869 = vunpack.c.l.b16 %v814
      %v870 = vunpack.c.l.b16 %v815
      %v871 = vunpack.c.l.b16 %v816
      %v872 = vunpack.c.l.b16 %v817
      %v873 = vunpack.c.l.b16 %v818
      %v874 = vunpack.c.l.b16 %v819
      %v875 = vunpack.c.l.b16 %v820
      %v876 = vunpack.c.l.b16 %v821
      %v877 = vunpack.c.l.b16 %v822
      %v878 = vunpack.c.l.b16 %v823
      %v879 = vpack.c.b16 %v856, %v855
      %v880 = vpack.c.b16 %v858, %v857
      %v881 = vpack.c.b16 %v860, %v859
      %v882 = vpack.c.b16 %v862, %v861
      %v883 = vpack.c.b16 %v864, %v863
      %v884 = vpack.c.b16 %v866, %v865
      %v885 = vpack.c.b16 %v868, %v867
      %v886 = vpack.c.b16 %v870, %v869
      %v887 = vpack.c.b16 %v872, %v871
      %v888 = vpack.c.b16 %v874, %v873
      %v889 = vpack.c.b16 %v876, %v875
      %v890 = vpack.c.b16 %v878, %v877
      %vm903 = vcmask 523264
      %v905 = vsel %vm903, %v740, 0
      %907 = vmatprep.subr.bf16.mxu0 0
      %908 = vmatpush1.bf16.msra.mxu0 %v879
      %909 = vmatprep.subr.bf16.mxu0 0
      %910 = vmatpush1.bf16.msra.mxu0 %v880
      %911 = vmatprep.subr.bf16.mxu0 0
      %912 = vmatpush1.bf16.msra.mxu0 %v881
      %913 = vmatprep.subr.bf16.mxu0 0
      %914 = vmatpush1.bf16.msra.mxu0 %v882
      %915 = vmatprep.subr.bf16.mxu0 0
      %916 = vmatpush1.bf16.msra.mxu0 %v883
      %917 = vmatprep.subr.bf16.mxu0 0
      %918 = vmatpush1.bf16.msra.mxu0 %v884
      %919 = vmatprep.subr.bf16.mxu0 0
      %920 = vmatpush1.bf16.msra.mxu0 %v885
      %921 = vmatprep.subr.bf16.mxu0 0
      %922 = vmatpush1.bf16.msra.mxu0 %v886
      %923 = vmatprep.subr.bf16.mxu0 0
      %924 = vmatpush1.bf16.msra.mxu0 %v887
      %925 = vmatprep.subr.bf16.mxu0 0
      %926 = vmatpush1.bf16.msra.mxu0 %v888
      %927 = vmatprep.subr.bf16.mxu0 0
      %928 = vmatpush1.bf16.msra.mxu0 %v889
      %929 = vmatprep.subr.bf16.mxu0 0
      %930 = vmatpush1.bf16.msra.mxu0 %v890
      %931 = vmatprep.subr.bf16.mxu0 0
      %932 = vmatpush1.bf16.msra.mxu0 0
      %933 = vmatprep.subr.bf16.mxu0 0
      %934 = vmatpush1.bf16.msra.mxu0 0
      %935 = vmatprep.subr.bf16.mxu0 0
      %936 = vmatpush1.bf16.msra.mxu0 0
      %937 = vmatprep.subr.bf16.mxu0 0
      %938 = vmatpush1.bf16.msra.mxu0 0
      %939 = vmatprep.mubr.bf16.mxu0 %v905
      %940 = vmatmul.mubr.bf16.gmra.mrb[0].mxu0 %v799
      %v941 = vpop.f32.mrb[0].mxu0
      %v942 = vadd.f32 %v829, %v941
      %v943 = vpop.f32.mrb[0].mxu0
      %v944 = vpop.f32.mrb[0].mxu0
      %v945 = vpop.f32.mrb[0].mxu0
      %946 = vdwg.mxu0
      %v947 = vld [vmem:[%s6] sm:$0xff]
      %v948 = vld [vmem:[%s6 + $0x8] sm:$0xff]
      %v949 = vld [vmem:[%s6 + $0x10] sm:$0xff]
      %v950 = vld [vmem:[%s6 + $0x18] sm:$0xff]
      %v951 = vld [vmem:[%s6 + $0x20] sm:$0xff]
      %v952 = vld [vmem:[%s6 + $0x28] sm:$0xff]
      %v953 = vld [vmem:[%s6 + $0x30] sm:$0xff]
      %v954 = vld [vmem:[%s6 + $0x38] sm:$0xff]
      %v963 = vunpack.c.l.b16 %v947
      %v964 = vunpack.c.h.b16 %v947
      %v965 = vunpack.c.l.b16 %v948
      %v966 = vunpack.c.h.b16 %v948
      %v967 = vunpack.c.l.b16 %v949
      %v968 = vunpack.c.h.b16 %v949
      %v969 = vunpack.c.l.b16 %v950
      %v970 = vunpack.c.h.b16 %v950
      %v971 = vunpack.c.l.b16 %v951
      %v972 = vunpack.c.h.b16 %v951
      %v973 = vunpack.c.l.b16 %v952
      %v974 = vunpack.c.h.b16 %v952
      %v975 = vunpack.c.l.b16 %v953
      %v976 = vunpack.c.h.b16 %v953
      %v977 = vunpack.c.l.b16 %v954
      %v978 = vunpack.c.h.b16 %v954
      %v979 = vpack.c.b16 %v965, %v963
      %v980 = vpack.c.b16 %v966, %v964
      %v981 = vpack.c.b16 %v969, %v967
      %v982 = vpack.c.b16 %v970, %v968
      %v983 = vpack.c.b16 %v973, %v971
      %v984 = vpack.c.b16 %v974, %v972
      %v985 = vpack.c.b16 %v977, %v975
      %v986 = vpack.c.b16 %v978, %v976
      %995 = vmatprep.subr.bf16.mxu0 %v980
      %996 = vmatpush1.bf16.msra.mxu0 %v979
      %997 = vmatprep.subr.bf16.mxu0 %v982
      %998 = vmatpush1.bf16.msra.mxu0 %v981
      %999 = vmatprep.subr.bf16.mxu0 %v984
      %1000 = vmatpush1.bf16.msra.mxu0 %v983
      %1001 = vmatprep.subr.bf16.mxu0 %v986
      %1002 = vmatpush1.bf16.msra.mxu0 %v985
      %1003 = vmatprep.subr.bf16.mxu0 0
      %1004 = vmatpush1.bf16.msra.mxu0 0
      %1005 = vmatprep.subr.bf16.mxu0 0
      %1006 = vmatpush1.bf16.msra.mxu0 0
      %1007 = vmatprep.subr.bf16.mxu0 0
      %1008 = vmatpush1.bf16.msra.mxu0 0
      %1009 = vmatprep.subr.bf16.mxu0 0
      %1010 = vmatpush1.bf16.msra.mxu0 0
      %1011 = vmatprep.subr.bf16.mxu0 0
      %1012 = vmatpush1.bf16.msra.mxu0 0
      %1013 = vmatprep.subr.bf16.mxu0 0
      %1014 = vmatpush1.bf16.msra.mxu0 0
      %1015 = vmatprep.subr.bf16.mxu0 0
      %1016 = vmatpush1.bf16.msra.mxu0 0
      %1017 = vmatprep.subr.bf16.mxu0 0
      %1018 = vmatpush1.bf16.msra.mxu0 0
      %1019 = vmatprep.subr.bf16.mxu0 0
      %1020 = vmatpush1.bf16.msra.mxu0 0
      %1021 = vmatprep.subr.bf16.mxu0 0
      %1022 = vmatpush1.bf16.msra.mxu0 0
      %1023 = vmatprep.subr.bf16.mxu0 0
      %1024 = vmatpush1.bf16.msra.mxu0 0
      %1025 = vmatprep.subr.bf16.mxu0 0
      %1026 = vmatpush1.bf16.msra.mxu0 0
      %1027 = vmatprep.mubr.bf16.mxu0 0
      %1028 = vmatmul.mubr.bf16.gmra.mrb[0].mxu0 %v905
      %v1029 = vpop.f32.mrb[0].mxu0
      %v1030 = vadd.f32 0.0, %v1029
      %v1031 = vpop.f32.mrb[0].mxu0
      %v1032 = vadd.f32 0.0, %v1031
      %v1033 = vpop.f32.mrb[0].mxu0
      %v1034 = vpop.f32.mrb[0].mxu0
      %1035 = vdwg.mxu0
      %v1036 = vpack.c.bf16 %v1030, %v1030
      %v1037 = vpack.c.bf16 %v1032, %v1032
      %v1039 = vrot.slane %v1037, 4
      %vm1040 = vcmask 1043456
      %v1043 = vsel %vm1040, %v1036, %v1039
      %v1045 = vld [vmem:[%s7] sm:$0x1]
      %v1047 = vlaneseq
      %v1048 = vshrl.u32 %v1047, 7
      %v1049 = vsub.s32 0, %v1048
      %v1050 = vrot.slane %v1045, %v1049
      %v1054 = vunpack.c.l.b16 %v744
      %v1055 = vunpack.c.l.b16 %v745
      %v1056 = vpack.c.b16 %v1055, %v1054
      %vm1057 = vcmask 130048
      %v1059 = vsel %vm1057, %v1056, 0
      %1061 = vmatprep.subr.bf16.mxu0 0
      %1062 = vmatpush1.bf16.msra.mxu0 %v1043
      %1063 = vmatprep.subr.bf16.mxu0 0
      %1064 = vmatpush1.bf16.msra.mxu0 0
      %1065 = vmatprep.subr.bf16.mxu0 0
      %1066 = vmatpush1.bf16.msra.mxu0 0
      %1067 = vmatprep.subr.bf16.mxu0 0
      %1068 = vmatpush1.bf16.msra.mxu0 0
      %1069 = vmatprep.subr.bf16.mxu0 0
      %1070 = vmatpush1.bf16.msra.mxu0 0
      %1071 = vmatprep.subr.bf16.mxu0 0
      %1072 = vmatpush1.bf16.msra.mxu0 0
      %1073 = vmatprep.subr.bf16.mxu0 0
      %1074 = vmatpush1.bf16.msra.mxu0 0
      %1075 = vmatprep.subr.bf16.mxu0 0
      %1076 = vmatpush1.bf16.msra.mxu0 0
      %1077 = vmatprep.subr.bf16.mxu0 0
      %1078 = vmatpush1.bf16.msra.mxu0 0
      %1079 = vmatprep.subr.bf16.mxu0 0
      %1080 = vmatpush1.bf16.msra.mxu0 0
      %1081 = vmatprep.subr.bf16.mxu0 0
      %1082 = vmatpush1.bf16.msra.mxu0 0
      %1083 = vmatprep.subr.bf16.mxu0 0
      %1084 = vmatpush1.bf16.msra.mxu0 0
      %1085 = vmatprep.subr.bf16.mxu0 0
      %1086 = vmatpush1.bf16.msra.mxu0 0
      %1087 = vmatprep.subr.bf16.mxu0 0
      %1088 = vmatpush1.bf16.msra.mxu0 0
      %1089 = vmatprep.subr.bf16.mxu0 0
      %1090 = vmatpush1.bf16.msra.mxu0 0
      %1091 = vmatprep.subr.bf16.mxu0 0
      %1092 = vmatpush1.bf16.msra.mxu0 0
      %1093 = vmatprep.mubr.bf16.mxu0 0
      %1094 = vmatmul.mubr.bf16.gmra.mrb[0].mxu0 %v1059
      %v1095 = vpop.f32.mrb[0].mxu0
      %v1096 = vadd.f32 %v1050, %v1095
      %v1097 = vpop.f32.mrb[0].mxu0
      %v1098 = vpop.f32.mrb[0].mxu0
      %v1099 = vadd.f32 %v1050, %v1098
      %v1100 = vpop.f32.mrb[0].mxu0
      %1101 = vdwg.mxu0
      %v1102 = vunpack.c.l.bf16 %v741
      %v1103 = vunpack.c.l.bf16 %v742
      %v1104 = vadd.f32 %v1102, %v1096
      %v1105 = vadd.f32 %v1103, %v1099
      %v1106 = vpack.c.bf16 %v1105, %v1104
      %v1107 = vld [vmem:[%s8] sm:$0xf]
      %v1108 = vld [vmem:[%s8 + $0x4] sm:$0xf]
      %v1109 = vld [vmem:[%s8 + $0x8] sm:$0xf]
      %v1110 = vld [vmem:[%s8 + $0xc] sm:$0xf]
      %v1111 = vld [vmem:[%s8 + $0x10] sm:$0xf]
      %v1112 = vld [vmem:[%s8 + $0x14] sm:$0xf]
      %v1113 = vld [vmem:[%s8 + $0x18] sm:$0xf]
      %v1114 = vld [vmem:[%s8 + $0x1c] sm:$0xf]
      %v1115 = vld [vmem:[%s8 + $0x20] sm:$0xf]
      %v1116 = vld [vmem:[%s8 + $0x24] sm:$0xf]
      %v1117 = vld [vmem:[%s8 + $0x28] sm:$0xf]
      %v1118 = vld [vmem:[%s8 + $0x2c] sm:$0xf]
      %v1119 = vld [vmem:[%s8 + $0x30] sm:$0xf]
      %v1120 = vld [vmem:[%s8 + $0x34] sm:$0xf]
      %v1121 = vld [vmem:[%s8 + $0x38] sm:$0xf]
      %v1122 = vld [vmem:[%s8 + $0x3c] sm:$0xf]
      %v1123 = vld [vmem:[%s9] sm:$0x1]
      %v1125 = vlaneseq
      %v1126 = vshrl.u32 %v1125, 7
      %v1127 = vsub.s32 0, %v1126
      %v1128 = vrot.slane %v1123, %v1127
      %v1146 = vunpack.c.l.b16 %v1107
      %v1147 = vunpack.c.l.b16 %v1108
      %v1148 = vunpack.c.l.b16 %v1109
      %v1149 = vunpack.c.l.b16 %v1110
      %v1150 = vunpack.c.l.b16 %v1111
      %v1151 = vunpack.c.l.b16 %v1112
      %v1152 = vunpack.c.l.b16 %v1113
      %v1153 = vunpack.c.l.b16 %v1114
      %v1154 = vunpack.c.l.b16 %v1115
      %v1155 = vunpack.c.l.b16 %v1116
      %v1156 = vunpack.c.l.b16 %v1117
      %v1157 = vunpack.c.l.b16 %v1118
      %v1158 = vunpack.c.l.b16 %v1119
      %v1159 = vunpack.c.l.b16 %v1120
      %v1160 = vunpack.c.l.b16 %v1121
      %v1161 = vunpack.c.l.b16 %v1122
      %v1162 = vpack.c.b16 %v1147, %v1146
      %v1163 = vpack.c.b16 %v1149, %v1148
      %v1164 = vpack.c.b16 %v1151, %v1150
      %v1165 = vpack.c.b16 %v1153, %v1152
      %v1166 = vpack.c.b16 %v1155, %v1154
      %v1167 = vpack.c.b16 %v1157, %v1156
      %v1168 = vpack.c.b16 %v1159, %v1158
      %v1169 = vpack.c.b16 %v1161, %v1160
      %1178 = vmatprep.subr.bf16.mxu0 0
      %1179 = vmatpush1.bf16.msra.mxu0 %v1162
      %1180 = vmatprep.subr.bf16.mxu0 0
      %1181 = vmatpush1.bf16.msra.mxu0 %v1163
      %1182 = vmatprep.subr.bf16.mxu0 0
      %1183 = vmatpush1.bf16.msra.mxu0 %v1164
      %1184 = vmatprep.subr.bf16.mxu0 0
      %1185 = vmatpush1.bf16.msra.mxu0 %v1165
      %1186 = vmatprep.subr.bf16.mxu0 0
      %1187 = vmatpush1.bf16.msra.mxu0 %v1166
      %1188 = vmatprep.subr.bf16.mxu0 0
      %1189 = vmatpush1.bf16.msra.mxu0 %v1167
      %1190 = vmatprep.subr.bf16.mxu0 0
      %1191 = vmatpush1.bf16.msra.mxu0 %v1168
      %1192 = vmatprep.subr.bf16.mxu0 0
      %1193 = vmatpush1.bf16.msra.mxu0 %v1169
      %1194 = vmatprep.subr.bf16.mxu0 0
      %1195 = vmatpush1.bf16.msra.mxu0 0
      %1196 = vmatprep.subr.bf16.mxu0 0
      %1197 = vmatpush1.bf16.msra.mxu0 0
      %1198 = vmatprep.subr.bf16.mxu0 0
      %1199 = vmatpush1.bf16.msra.mxu0 0
      %1200 = vmatprep.subr.bf16.mxu0 0
      %1201 = vmatpush1.bf16.msra.mxu0 0
      %1202 = vmatprep.subr.bf16.mxu0 0
      %1203 = vmatpush1.bf16.msra.mxu0 0
      %1204 = vmatprep.subr.bf16.mxu0 0
      %1205 = vmatpush1.bf16.msra.mxu0 0
      %1206 = vmatprep.subr.bf16.mxu0 0
      %1207 = vmatpush1.bf16.msra.mxu0 0
      %1208 = vmatprep.subr.bf16.mxu0 0
      %1209 = vmatpush1.bf16.msra.mxu0 0
      %1210 = vmatprep.mubr.bf16.mxu0 0
      %1211 = vmatmul.mubr.bf16.gmra.mrb[0].mxu0 %v1106
      %v1212 = vpop.f32.mrb[0].mxu0
      %v1213 = vadd.f32 %v1128, %v1212
      %v1214 = vpop.f32.mrb[0].mxu0
      %v1215 = vpop.f32.mrb[0].mxu0
      %v1216 = vadd.f32 %v1128, %v1215
      %v1217 = vpop.f32.mrb[0].mxu0
      %1218 = vdwg.mxu0
      %v1219 = vpack.c.bf16 %v1216, %v1213
      %v1220 = vmax.f32 %v942, 0.0
      %v1221 = vpack.c.bf16 %v1220, %v1220
      %v1223 = vsel %vm755, %v1219, 0
      %1225 = vmatprep.subr.bf16.mxu0 0
      %1226 = vmatpush1.bf16.msra.mxu0 %v1223
      %1227 = vmatprep.subr.bf16.mxu0 0
      %1228 = vmatpush1.bf16.msra.mxu0 0
      %1229 = vmatprep.subr.bf16.mxu0 0
      %1230 = vmatpush1.bf16.msra.mxu0 0
      %1231 = vmatprep.subr.bf16.mxu0 0
      %1232 = vmatpush1.bf16.msra.mxu0 0
      %1233 = vmatprep.subr.bf16.mxu0 0
      %1234 = vmatpush1.bf16.msra.mxu0 0
      %1235 = vmatprep.subr.bf16.mxu0 0
      %1236 = vmatpush1.bf16.msra.mxu0 0
      %1237 = vmatprep.subr.bf16.mxu0 0
      %1238 = vmatpush1.bf16.msra.mxu0 0
      %1239 = vmatprep.subr.bf16.mxu0 0
      %1240 = vmatpush1.bf16.msra.mxu0 0
      %1241 = vmatprep.subr.bf16.mxu0 0
      %1242 = vmatpush1.bf16.msra.mxu0 0
      %1243 = vmatprep.subr.bf16.mxu0 0
      %1244 = vmatpush1.bf16.msra.mxu0 0
      %1245 = vmatprep.subr.bf16.mxu0 0
      %1246 = vmatpush1.bf16.msra.mxu0 0
      %1247 = vmatprep.subr.bf16.mxu0 0
      %1248 = vmatpush1.bf16.msra.mxu0 0
      %1249 = vmatprep.subr.bf16.mxu0 0
      %1250 = vmatpush1.bf16.msra.mxu0 0
      %1251 = vmatprep.subr.bf16.mxu0 0
      %1252 = vmatpush1.bf16.msra.mxu0 0
      %1253 = vmatprep.subr.bf16.mxu0 0
      %1254 = vmatpush1.bf16.msra.mxu0 0
      %1255 = vmatprep.subr.bf16.mxu0 0
      %1256 = vmatpush1.bf16.msra.mxu0 0
      %1257 = vmatprep.mubr.bf16.mxu0 0
      %1258 = vmatmul.mubr.bf16.gmra.mrb[0].mxu0 %v753
      %v1259 = vpop.f32.mrb[0].mxu0
      %v1260 = vadd.f32 0.0, %v1259
      %v1261 = vpop.f32.mrb[0].mxu0
      %v1262 = vpop.f32.mrb[0].mxu0
      %v1263 = vpop.f32.mrb[0].mxu0
      %1264 = vdwg.mxu0
      %v1265 = vpack.c.bf16 %v1260, %v1260
      %s1266 = scalar_lea.vmem %s4, 96
      %v1267 = vld [vmem:[%s1266] sm:$0xf]
      %v1268 = vld [vmem:[%s1266 + $0x4] sm:$0xf]
      %v1269 = vld [vmem:[%s1266 + $0x8] sm:$0xf]
      %v1270 = vld [vmem:[%s1266 + $0xc] sm:$0xf]
      %v1271 = vld [vmem:[%s1266 + $0x10] sm:$0xf]
      %v1272 = vld [vmem:[%s1266 + $0x14] sm:$0xf]
      %v1273 = vld [vmem:[%s1266 + $0x18] sm:$0xf]
      %v1274 = vld [vmem:[%s1266 + $0x1c] sm:$0xf]
      %v1275 = vld [vmem:[%s1266 + $0x20] sm:$0xf]
      %v1276 = vld [vmem:[%s1266 + $0x24] sm:$0xf]
      %v1277 = vld [vmem:[%s1266 + $0x28] sm:$0xf]
      %v1278 = vld [vmem:[%s1266 + $0x2c] sm:$0xf]
      %v1279 = vld [vmem:[%s1266 + $0x30] sm:$0xf]
      %v1280 = vld [vmem:[%s1266 + $0x34] sm:$0xf]
      %v1281 = vld [vmem:[%s1266 + $0x38] sm:$0xf]
      %v1282 = vld [vmem:[%s1266 + $0x3c] sm:$0xf]
      %v1283 = vld [vmem:[%s1266 + $0x40] sm:$0xf]
      %v1284 = vld [vmem:[%s1266 + $0x44] sm:$0xf]
      %v1285 = vld [vmem:[%s1266 + $0x48] sm:$0xf]
      %v1286 = vld [vmem:[%s1266 + $0x4c] sm:$0xf]
      %v1287 = vld [vmem:[%s1266 + $0x50] sm:$0xf]
      %v1288 = vld [vmem:[%s1266 + $0x54] sm:$0xf]
      %v1289 = vld [vmem:[%s1266 + $0x58] sm:$0xf]
      %v1290 = vld [vmem:[%s1266 + $0x5c] sm:$0xf]
      %s1291 = scalar_lea.vmem %s5, 1
      %v1292 = vld [vmem:[%s1291] sm:$0x1]
      %v1294 = vlaneseq
      %v1295 = vshrl.u32 %v1294, 7
      %v1296 = vsub.s32 0, %v1295
      %v1297 = vrot.slane %v1292, %v1296
      %v1323 = vunpack.c.l.b16 %v1267
      %v1324 = vunpack.c.l.b16 %v1268
      %v1325 = vunpack.c.l.b16 %v1269
      %v1326 = vunpack.c.l.b16 %v1270
      %v1327 = vunpack.c.l.b16 %v1271
      %v1328 = vunpack.c.l.b16 %v1272
      %v1329 = vunpack.c.l.b16 %v1273
      %v1330 = vunpack.c.l.b16 %v1274
      %v1331 = vunpack.c.l.b16 %v1275
      %v1332 = vunpack.c.l.b16 %v1276
      %v1333 = vunpack.c.l.b16 %v1277
      %v1334 = vunpack.c.l.b16 %v1278
      %v1335 = vunpack.c.l.b16 %v1279
      %v1336 = vunpack.c.l.b16 %v1280
      %v1337 = vunpack.c.l.b16 %v1281
      %v1338 = vunpack.c.l.b16 %v1282
      %v1339 = vunpack.c.l.b16 %v1283
      %v1340 = vunpack.c.l.b16 %v1284
      %v1341 = vunpack.c.l.b16 %v1285
      %v1342 = vunpack.c.l.b16 %v1286
      %v1343 = vunpack.c.l.b16 %v1287
      %v1344 = vunpack.c.l.b16 %v1288
      %v1345 = vunpack.c.l.b16 %v1289
      %v1346 = vunpack.c.l.b16 %v1290
      %v1347 = vpack.c.b16 %v1324, %v1323
      %v1348 = vpack.c.b16 %v1326, %v1325
      %v1349 = vpack.c.b16 %v1328, %v1327
      %v1350 = vpack.c.b16 %v1330, %v1329
      %v1351 = vpack.c.b16 %v1332, %v1331
      %v1352 = vpack.c.b16 %v1334, %v1333
      %v1353 = vpack.c.b16 %v1336, %v1335
      %v1354 = vpack.c.b16 %v1338, %v1337
      %v1355 = vpack.c.b16 %v1340, %v1339
      %v1356 = vpack.c.b16 %v1342, %v1341
      %v1357 = vpack.c.b16 %v1344, %v1343
      %v1358 = vpack.c.b16 %v1346, %v1345
      %v1372 = vsel %vm903, %v1221, 0
      %1374 = vmatprep.subr.bf16.mxu0 0
      %1375 = vmatpush1.bf16.msra.mxu0 %v1347
      %1376 = vmatprep.subr.bf16.mxu0 0
      %1377 = vmatpush1.bf16.msra.mxu0 %v1348
      %1378 = vmatprep.subr.bf16.mxu0 0
      %1379 = vmatpush1.bf16.msra.mxu0 %v1349
      %1380 = vmatprep.subr.bf16.mxu0 0
      %1381 = vmatpush1.bf16.msra.mxu0 %v1350
      %1382 = vmatprep.subr.bf16.mxu0 0
      %1383 = vmatpush1.bf16.msra.mxu0 %v1351
      %1384 = vmatprep.subr.bf16.mxu0 0
      %1385 = vmatpush1.bf16.msra.mxu0 %v1352
      %1386 = vmatprep.subr.bf16.mxu0 0
      %1387 = vmatpush1.bf16.msra.mxu0 %v1353
      %1388 = vmatprep.subr.bf16.mxu0 0
      %1389 = vmatpush1.bf16.msra.mxu0 %v1354
      %1390 = vmatprep.subr.bf16.mxu0 0
      %1391 = vmatpush1.bf16.msra.mxu0 %v1355
      %1392 = vmatprep.subr.bf16.mxu0 0
      %1393 = vmatpush1.bf16.msra.mxu0 %v1356
      %1394 = vmatprep.subr.bf16.mxu0 0
      %1395 = vmatpush1.bf16.msra.mxu0 %v1357
      %1396 = vmatprep.subr.bf16.mxu0 0
      %1397 = vmatpush1.bf16.msra.mxu0 %v1358
      %1398 = vmatprep.subr.bf16.mxu0 0
      %1399 = vmatpush1.bf16.msra.mxu0 0
      %1400 = vmatprep.subr.bf16.mxu0 0
      %1401 = vmatpush1.bf16.msra.mxu0 0
      %1402 = vmatprep.subr.bf16.mxu0 0
      %1403 = vmatpush1.bf16.msra.mxu0 0
      %1404 = vmatprep.subr.bf16.mxu0 0
      %1405 = vmatpush1.bf16.msra.mxu0 0
      %1406 = vmatprep.mubr.bf16.mxu0 %v1372
      %1407 = vmatmul.mubr.bf16.gmra.mrb[0].mxu0 %v1265
      %v1408 = vpop.f32.mrb[0].mxu0
      %v1409 = vadd.f32 %v1297, %v1408
      %v1410 = vpop.f32.mrb[0].mxu0
      %v1411 = vpop.f32.mrb[0].mxu0
      %v1412 = vpop.f32.mrb[0].mxu0
      %1413 = vdwg.mxu0
      %s1414 = scalar_lea.vmem %s6, 64
      %v1415 = vld [vmem:[%s1414] sm:$0xff]
      %v1416 = vld [vmem:[%s1414 + $0x8] sm:$0xff]
      %v1417 = vld [vmem:[%s1414 + $0x10] sm:$0xff]
      %v1418 = vld [vmem:[%s1414 + $0x18] sm:$0xff]
      %v1419 = vld [vmem:[%s1414 + $0x20] sm:$0xff]
      %v1420 = vld [vmem:[%s1414 + $0x28] sm:$0xff]
      %v1421 = vld [vmem:[%s1414 + $0x30] sm:$0xff]
      %v1422 = vld [vmem:[%s1414 + $0x38] sm:$0xff]
      %v1431 = vunpack.c.l.b16 %v1415
      %v1432 = vunpack.c.h.b16 %v1415
      %v1433 = vunpack.c.l.b16 %v1416
      %v1434 = vunpack.c.h.b16 %v1416
      %v1435 = vunpack.c.l.b16 %v1417
      %v1436 = vunpack.c.h.b16 %v1417
      %v1437 = vunpack.c.l.b16 %v1418
      %v1438 = vunpack.c.h.b16 %v1418
      %v1439 = vunpack.c.l.b16 %v1419
      %v1440 = vunpack.c.h.b16 %v1419
      %v1441 = vunpack.c.l.b16 %v1420
      %v1442 = vunpack.c.h.b16 %v1420
      %v1443 = vunpack.c.l.b16 %v1421
      %v1444 = vunpack.c.h.b16 %v1421
      %v1445 = vunpack.c.l.b16 %v1422
      %v1446 = vunpack.c.h.b16 %v1422
      %v1447 = vpack.c.b16 %v1433, %v1431
      %v1448 = vpack.c.b16 %v1434, %v1432
      %v1449 = vpack.c.b16 %v1437, %v1435
      %v1450 = vpack.c.b16 %v1438, %v1436
      %v1451 = vpack.c.b16 %v1441, %v1439
      %v1452 = vpack.c.b16 %v1442, %v1440
      %v1453 = vpack.c.b16 %v1445, %v1443
      %v1454 = vpack.c.b16 %v1446, %v1444
      %1463 = vmatprep.subr.bf16.mxu0 %v1448
      %1464 = vmatpush1.bf16.msra.mxu0 %v1447
      %1465 = vmatprep.subr.bf16.mxu0 %v1450
      %1466 = vmatpush1.bf16.msra.mxu0 %v1449
      %1467 = vmatprep.subr.bf16.mxu0 %v1452
      %1468 = vmatpush1.bf16.msra.mxu0 %v1451
      %1469 = vmatprep.subr.bf16.mxu0 %v1454
      %1470 = vmatpush1.bf16.msra.mxu0 %v1453
      %1471 = vmatprep.subr.bf16.mxu0 0
      %1472 = vmatpush1.bf16.msra.mxu0 0
      %1473 = vmatprep.subr.bf16.mxu0 0
      %1474 = vmatpush1.bf16.msra.mxu0 0
      %1475 = vmatprep.subr.bf16.mxu0 0
      %1476 = vmatpush1.bf16.msra.mxu0 0
      %1477 = vmatprep.subr.bf16.mxu0 0
      %1478 = vmatpush1.bf16.msra.mxu0 0
      %1479 = vmatprep.subr.bf16.mxu0 0
      %1480 = vmatpush1.bf16.msra.mxu0 0
      %1481 = vmatprep.subr.bf16.mxu0 0
      %1482 = vmatpush1.bf16.msra.mxu0 0
      %1483 = vmatprep.subr.bf16.mxu0 0
      %1484 = vmatpush1.bf16.msra.mxu0 0
      %1485 = vmatprep.subr.bf16.mxu0 0
      %1486 = vmatpush1.bf16.msra.mxu0 0
      %1487 = vmatprep.subr.bf16.mxu0 0
      %1488 = vmatpush1.bf16.msra.mxu0 0
      %1489 = vmatprep.subr.bf16.mxu0 0
      %1490 = vmatpush1.bf16.msra.mxu0 0
      %1491 = vmatprep.subr.bf16.mxu0 0
      %1492 = vmatpush1.bf16.msra.mxu0 0
      %1493 = vmatprep.subr.bf16.mxu0 0
      %1494 = vmatpush1.bf16.msra.mxu0 0
      %1495 = vmatprep.mubr.bf16.mxu0 0
      %1496 = vmatmul.mubr.bf16.gmra.mrb[0].mxu0 %v1372
      %v1497 = vpop.f32.mrb[0].mxu0
      %v1498 = vadd.f32 0.0, %v1497
      %v1499 = vpop.f32.mrb[0].mxu0
      %v1500 = vadd.f32 0.0, %v1499
      %v1501 = vpop.f32.mrb[0].mxu0
      %v1502 = vpop.f32.mrb[0].mxu0
      %1503 = vdwg.mxu0
      %v1504 = vpack.c.bf16 %v1498, %v1498
      %v1505 = vpack.c.bf16 %v1500, %v1500
      %v1507 = vrot.slane %v1505, 4
      %v1510 = vsel %vm1040, %v1504, %v1507
      %s1512 = scalar_lea.vmem %s7, 1
      %v1513 = vld [vmem:[%s1512] sm:$0x1]
      %v1515 = vlaneseq
      %v1516 = vshrl.u32 %v1515, 7
      %v1517 = vsub.s32 0, %v1516
      %v1518 = vrot.slane %v1513, %v1517
      %1520 = vmatprep.subr.bf16.mxu0 0
      %1521 = vmatpush1.bf16.msra.mxu0 %v1510
      %1522 = vmatprep.subr.bf16.mxu0 0
      %1523 = vmatpush1.bf16.msra.mxu0 0
      %1524 = vmatprep.subr.bf16.mxu0 0
      %1525 = vmatpush1.bf16.msra.mxu0 0
      %1526 = vmatprep.subr.bf16.mxu0 0
      %1527 = vmatpush1.bf16.msra.mxu0 0
      %1528 = vmatprep.subr.bf16.mxu0 0
      %1529 = vmatpush1.bf16.msra.mxu0 0
      %1530 = vmatprep.subr.bf16.mxu0 0
      %1531 = vmatpush1.bf16.msra.mxu0 0
      %1532 = vmatprep.subr.bf16.mxu0 0
      %1533 = vmatpush1.bf16.msra.mxu0 0
      %1534 = vmatprep.subr.bf16.mxu0 0
      %1535 = vmatpush1.bf16.msra.mxu0 0
      %1536 = vmatprep.subr.bf16.mxu0 0
      %1537 = vmatpush1.bf16.msra.mxu0 0
      %1538 = vmatprep.subr.bf16.mxu0 0
      %1539 = vmatpush1.bf16.msra.mxu0 0
      %1540 = vmatprep.subr.bf16.mxu0 0
      %1541 = vmatpush1.bf16.msra.mxu0 0
      %1542 = vmatprep.subr.bf16.mxu0 0
      %1543 = vmatpush1.bf16.msra.mxu0 0
      %1544 = vmatprep.subr.bf16.mxu0 0
      %1545 = vmatpush1.bf16.msra.mxu0 0
      %1546 = vmatprep.subr.bf16.mxu0 0
      %1547 = vmatpush1.bf16.msra.mxu0 0
      %1548 = vmatprep.subr.bf16.mxu0 0
      %1549 = vmatpush1.bf16.msra.mxu0 0
      %1550 = vmatprep.subr.bf16.mxu0 0
      %1551 = vmatpush1.bf16.msra.mxu0 0
      %1552 = vmatprep.mubr.bf16.mxu0 0
      %1553 = vmatmul.mubr.bf16.gmra.mrb[0].mxu0 %v1059
      %v1554 = vpop.f32.mrb[0].mxu0
      %v1555 = vadd.f32 %v1518, %v1554
      %v1556 = vpop.f32.mrb[0].mxu0
      %v1557 = vpop.f32.mrb[0].mxu0
      %v1558 = vadd.f32 %v1518, %v1557
      %v1559 = vpop.f32.mrb[0].mxu0
      %1560 = vdwg.mxu0
      %v1561 = vunpack.c.l.bf16 %v1219
      %v1562 = vunpack.c.h.bf16 %v1219
      %v1563 = vadd.f32 %v1561, %v1555
      %v1564 = vadd.f32 %v1562, %v1558
      %v1565 = vpack.c.bf16 %v1564, %v1563
      %s1566 = scalar_lea.vmem %s8, 64
      %v1567 = vld [vmem:[%s1566] sm:$0xf]
      %v1568 = vld [vmem:[%s1566 + $0x4] sm:$0xf]
      %v1569 = vld [vmem:[%s1566 + $0x8] sm:$0xf]
      %v1570 = vld [vmem:[%s1566 + $0xc] sm:$0xf]
      %v1571 = vld [vmem:[%s1566 + $0x10] sm:$0xf]
      %v1572 = vld [vmem:[%s1566 + $0x14] sm:$0xf]
      %v1573 = vld [vmem:[%s1566 + $0x18] sm:$0xf]
      %v1574 = vld [vmem:[%s1566 + $0x1c] sm:$0xf]
      %v1575 = vld [vmem:[%s1566 + $0x20] sm:$0xf]
      %v1576 = vld [vmem:[%s1566 + $0x24] sm:$0xf]
      %v1577 = vld [vmem:[%s1566 + $0x28] sm:$0xf]
      %v1578 = vld [vmem:[%s1566 + $0x2c] sm:$0xf]
      %v1579 = vld [vmem:[%s1566 + $0x30] sm:$0xf]
      %v1580 = vld [vmem:[%s1566 + $0x34] sm:$0xf]
      %v1581 = vld [vmem:[%s1566 + $0x38] sm:$0xf]
      %v1582 = vld [vmem:[%s1566 + $0x3c] sm:$0xf]
      %s1583 = scalar_lea.vmem %s9, 1
      %v1584 = vld [vmem:[%s1583] sm:$0x1]
      %v1586 = vlaneseq
      %v1587 = vshrl.u32 %v1586, 7
      %v1588 = vsub.s32 0, %v1587
      %v1589 = vrot.slane %v1584, %v1588
      %v1607 = vunpack.c.l.b16 %v1567
      %v1608 = vunpack.c.l.b16 %v1568
      %v1609 = vunpack.c.l.b16 %v1569
      %v1610 = vunpack.c.l.b16 %v1570
      %v1611 = vunpack.c.l.b16 %v1571
      %v1612 = vunpack.c.l.b16 %v1572
      %v1613 = vunpack.c.l.b16 %v1573
      %v1614 = vunpack.c.l.b16 %v1574
      %v1615 = vunpack.c.l.b16 %v1575
      %v1616 = vunpack.c.l.b16 %v1576
      %v1617 = vunpack.c.l.b16 %v1577
      %v1618 = vunpack.c.l.b16 %v1578
      %v1619 = vunpack.c.l.b16 %v1579
      %v1620 = vunpack.c.l.b16 %v1580
      %v1621 = vunpack.c.l.b16 %v1581
      %v1622 = vunpack.c.l.b16 %v1582
      %v1623 = vpack.c.b16 %v1608, %v1607
      %v1624 = vpack.c.b16 %v1610, %v1609
      %v1625 = vpack.c.b16 %v1612, %v1611
      %v1626 = vpack.c.b16 %v1614, %v1613
      %v1627 = vpack.c.b16 %v1616, %v1615
      %v1628 = vpack.c.b16 %v1618, %v1617
      %v1629 = vpack.c.b16 %v1620, %v1619
      %v1630 = vpack.c.b16 %v1622, %v1621
      %1639 = vmatprep.subr.bf16.mxu0 0
      %1640 = vmatpush1.bf16.msra.mxu0 %v1623
      %1641 = vmatprep.subr.bf16.mxu0 0
      %1642 = vmatpush1.bf16.msra.mxu0 %v1624
      %1643 = vmatprep.subr.bf16.mxu0 0
      %1644 = vmatpush1.bf16.msra.mxu0 %v1625
      %1645 = vmatprep.subr.bf16.mxu0 0
      %1646 = vmatpush1.bf16.msra.mxu0 %v1626
      %1647 = vmatprep.subr.bf16.mxu0 0
      %1648 = vmatpush1.bf16.msra.mxu0 %v1627
      %1649 = vmatprep.subr.bf16.mxu0 0
      %1650 = vmatpush1.bf16.msra.mxu0 %v1628
      %1651 = vmatprep.subr.bf16.mxu0 0
      %1652 = vmatpush1.bf16.msra.mxu0 %v1629
      %1653 = vmatprep.subr.bf16.mxu0 0
      %1654 = vmatpush1.bf16.msra.mxu0 %v1630
      %1655 = vmatprep.subr.bf16.mxu0 0
      %1656 = vmatpush1.bf16.msra.mxu0 0
      %1657 = vmatprep.subr.bf16.mxu0 0
      %1658 = vmatpush1.bf16.msra.mxu0 0
      %1659 = vmatprep.subr.bf16.mxu0 0
      %1660 = vmatpush1.bf16.msra.mxu0 0
      %1661 = vmatprep.subr.bf16.mxu0 0
      %1662 = vmatpush1.bf16.msra.mxu0 0
      %1663 = vmatprep.subr.bf16.mxu0 0
      %1664 = vmatpush1.bf16.msra.mxu0 0
      %1665 = vmatprep.subr.bf16.mxu0 0
      %1666 = vmatpush1.bf16.msra.mxu0 0
      %1667 = vmatprep.subr.bf16.mxu0 0
      %1668 = vmatpush1.bf16.msra.mxu0 0
      %1669 = vmatprep.subr.bf16.mxu0 0
      %1670 = vmatpush1.bf16.msra.mxu0 0
      %1671 = vmatprep.mubr.bf16.mxu0 0
      %1672 = vmatmul.mubr.bf16.gmra.mrb[0].mxu0 %v1565
      %v1673 = vpop.f32.mrb[0].mxu0
      %v1674 = vadd.f32 %v1589, %v1673
      %v1675 = vpop.f32.mrb[0].mxu0
      %v1676 = vpop.f32.mrb[0].mxu0
      %v1677 = vadd.f32 %v1589, %v1676
      %v1678 = vpop.f32.mrb[0].mxu0
      %1679 = vdwg.mxu0
      %v1680 = vpack.c.bf16 %v1677, %v1674
      %v1681 = vpack.c.bf16 %v1409, %v1409
      %v1682 = vld [vmem:[%s10] sm:$0xf]
      %v1683 = vld [vmem:[%s10 + $0x4] sm:$0xf]
      %v1684 = vld [vmem:[%s10 + $0x8] sm:$0xf]
      %v1685 = vld [vmem:[%s10 + $0xc] sm:$0xf]
      %v1686 = vld [vmem:[%s10 + $0x10] sm:$0xf]
      %v1687 = vld [vmem:[%s10 + $0x14] sm:$0xf]
      %v1688 = vld [vmem:[%s10 + $0x18] sm:$0xf]
      %v1689 = vld [vmem:[%s10 + $0x1c] sm:$0xf]
      %v1690 = vld [vmem:[%s11] sm:$0x1]
      %v1692 = vlaneseq
      %v1693 = vshrl.u32 %v1692, 7
      %v1694 = vsub.s32 0, %v1693
      %v1695 = vrot.slane %v1690, %v1694
      %v1705 = vunpack.c.l.b16 %v1682
      %v1706 = vunpack.c.l.b16 %v1683
      %v1707 = vunpack.c.l.b16 %v1684
      %v1708 = vunpack.c.l.b16 %v1685
      %v1709 = vunpack.c.l.b16 %v1686
      %v1710 = vunpack.c.l.b16 %v1687
      %v1711 = vunpack.c.l.b16 %v1688
      %v1712 = vunpack.c.l.b16 %v1689
      %v1713 = vpack.c.b16 %v1706, %v1705
      %v1714 = vpack.c.b16 %v1708, %v1707
      %v1715 = vpack.c.b16 %v1710, %v1709
      %v1716 = vpack.c.b16 %v1712, %v1711
      %v1722 = vsel %vm903, %v1681, 0
      %1724 = vmatprep.subr.bf16.mxu0 0
      %1725 = vmatpush1.bf16.msra.mxu0 %v1713
      %1726 = vmatprep.subr.bf16.mxu0 0
      %1727 = vmatpush1.bf16.msra.mxu0 %v1714
      %1728 = vmatprep.subr.bf16.mxu0 0
      %1729 = vmatpush1.bf16.msra.mxu0 %v1715
      %1730 = vmatprep.subr.bf16.mxu0 0
      %1731 = vmatpush1.bf16.msra.mxu0 %v1716
      %1732 = vmatprep.subr.bf16.mxu0 0
      %1733 = vmatpush1.bf16.msra.mxu0 0
      %1734 = vmatprep.subr.bf16.mxu0 0
      %1735 = vmatpush1.bf16.msra.mxu0 0
      %1736 = vmatprep.subr.bf16.mxu0 0
      %1737 = vmatpush1.bf16.msra.mxu0 0
      %1738 = vmatprep.subr.bf16.mxu0 0
      %1739 = vmatpush1.bf16.msra.mxu0 0
      %1740 = vmatprep.subr.bf16.mxu0 0
      %1741 = vmatpush1.bf16.msra.mxu0 0
      %1742 = vmatprep.subr.bf16.mxu0 0
      %1743 = vmatpush1.bf16.msra.mxu0 0
      %1744 = vmatprep.subr.bf16.mxu0 0
      %1745 = vmatpush1.bf16.msra.mxu0 0
      %1746 = vmatprep.subr.bf16.mxu0 0
      %1747 = vmatpush1.bf16.msra.mxu0 0
      %1748 = vmatprep.subr.bf16.mxu0 0
      %1749 = vmatpush1.bf16.msra.mxu0 0
      %1750 = vmatprep.subr.bf16.mxu0 0
      %1751 = vmatpush1.bf16.msra.mxu0 0
      %1752 = vmatprep.subr.bf16.mxu0 0
      %1753 = vmatpush1.bf16.msra.mxu0 0
      %1754 = vmatprep.subr.bf16.mxu0 0
      %1755 = vmatpush1.bf16.msra.mxu0 0
      %1756 = vmatprep.mubr.bf16.mxu0 0
      %1757 = vmatmul.mubr.bf16.gmra.mrb[0].mxu0 %v1722
      %v1758 = vpop.f32.mrb[0].mxu0
      %v1759 = vadd.f32 %v1695, %v1758
      %v1760 = vpop.f32.mrb[0].mxu0
      %v1761 = vpop.f32.mrb[0].mxu0
      %v1762 = vpop.f32.mrb[0].mxu0
      %1763 = vdwg.mxu0
      %v1764 = vmax.f32 %v1759, 0.0
      %v1765 = vpack.c.bf16 %v1764, %v1764
      %v1766 = vld [vmem:[%s12] sm:$0xf]
      %v1767 = vld [vmem:[%s12 + $0x4] sm:$0xf]
      %v1768 = vld [vmem:[%s12 + $0x8] sm:$0xf]
      %v1769 = vld [vmem:[%s12 + $0xc] sm:$0xf]
      %v1770 = vld [vmem:[%s12 + $0x10] sm:$0xf]
      %v1771 = vld [vmem:[%s12 + $0x14] sm:$0xf]
      %v1772 = vld [vmem:[%s12 + $0x18] sm:$0xf]
      %v1773 = vld [vmem:[%s12 + $0x1c] sm:$0xf]
      %v1774 = vld [vmem:[%s13] sm:$0x1]
      %v1776 = vlaneseq
      %v1777 = vshrl.u32 %v1776, 7
      %v1778 = vsub.s32 0, %v1777
      %v1779 = vrot.slane %v1774, %v1778
      %v1789 = vunpack.c.l.b16 %v1766
      %v1790 = vunpack.c.l.b16 %v1767
      %v1791 = vunpack.c.l.b16 %v1768
      %v1792 = vunpack.c.l.b16 %v1769
      %v1793 = vunpack.c.l.b16 %v1770
      %v1794 = vunpack.c.l.b16 %v1771
      %v1795 = vunpack.c.l.b16 %v1772
      %v1796 = vunpack.c.l.b16 %v1773
      %v1797 = vpack.c.b16 %v1790, %v1789
      %v1798 = vpack.c.b16 %v1792, %v1791
      %v1799 = vpack.c.b16 %v1794, %v1793
      %v1800 = vpack.c.b16 %v1796, %v1795
      %v1806 = vsel %vm903, %v1765, 0
      %1808 = vmatprep.subr.bf16.mxu0 0
      %1809 = vmatpush1.bf16.msra.mxu0 %v1797
      %1810 = vmatprep.subr.bf16.mxu0 0
      %1811 = vmatpush1.bf16.msra.mxu0 %v1798
      %1812 = vmatprep.subr.bf16.mxu0 0
      %1813 = vmatpush1.bf16.msra.mxu0 %v1799
      %1814 = vmatprep.subr.bf16.mxu0 0
      %1815 = vmatpush1.bf16.msra.mxu0 %v1800
      %1816 = vmatprep.subr.bf16.mxu0 0
      %1817 = vmatpush1.bf16.msra.mxu0 0
      %1818 = vmatprep.subr.bf16.mxu0 0
      %1819 = vmatpush1.bf16.msra.mxu0 0
      %1820 = vmatprep.subr.bf16.mxu0 0
      %1821 = vmatpush1.bf16.msra.mxu0 0
      %1822 = vmatprep.subr.bf16.mxu0 0
      %1823 = vmatpush1.bf16.msra.mxu0 0
      %1824 = vmatprep.subr.bf16.mxu0 0
      %1825 = vmatpush1.bf16.msra.mxu0 0
      %1826 = vmatprep.subr.bf16.mxu0 0
      %1827 = vmatpush1.bf16.msra.mxu0 0
      %1828 = vmatprep.subr.bf16.mxu0 0
      %1829 = vmatpush1.bf16.msra.mxu0 0
      %1830 = vmatprep.subr.bf16.mxu0 0
      %1831 = vmatpush1.bf16.msra.mxu0 0
      %1832 = vmatprep.subr.bf16.mxu0 0
      %1833 = vmatpush1.bf16.msra.mxu0 0
      %1834 = vmatprep.subr.bf16.mxu0 0
      %1835 = vmatpush1.bf16.msra.mxu0 0
      %1836 = vmatprep.subr.bf16.mxu0 0
      %1837 = vmatpush1.bf16.msra.mxu0 0
      %1838 = vmatprep.subr.bf16.mxu0 0
      %1839 = vmatpush1.bf16.msra.mxu0 0
      %1840 = vmatprep.mubr.bf16.mxu0 0
      %1841 = vmatmul.mubr.bf16.gmra.mrb[0].mxu0 %v1806
      %v1842 = vpop.f32.mrb[0].mxu0
      %v1843 = vadd.f32 %v1779, %v1842
      %v1844 = vpop.f32.mrb[0].mxu0
      %v1845 = vpop.f32.mrb[0].mxu0
      %v1846 = vpop.f32.mrb[0].mxu0
      %1847 = vdwg.mxu0
      %v1848 = vmax.f32 %v1843, 0.0
      %v1849 = vpack.c.bf16 %v1848, %v1848
      %v1850 = vld [vmem:[%s14] sm:$0xf]
      %v1851 = vld [vmem:[%s14 + $0x4] sm:$0xf]
      %v1852 = vld [vmem:[%s14 + $0x8] sm:$0xf]
      %v1853 = vld [vmem:[%s14 + $0xc] sm:$0xf]
      %v1854 = vld [vmem:[%s15] sm:$0x1]
      %v1856 = vlaneseq
      %v1857 = vshrl.u32 %v1856, 7
      %v1858 = vsub.s32 0, %v1857
      %v1859 = vrot.slane %v1854, %v1858
      %v1865 = vunpack.c.l.b16 %v1850
      %v1866 = vunpack.c.l.b16 %v1851
      %v1867 = vunpack.c.l.b16 %v1852
      %v1868 = vunpack.c.l.b16 %v1853
      %v1869 = vpack.c.b16 %v1866, %v1865
      %v1870 = vpack.c.b16 %v1868, %v1867
      %vm1873 = vcmask 261120
      %v1875 = vsel %vm1873, %v1849, 0
      %1877 = vmatprep.subr.bf16.mxu0 0
      %1878 = vmatpush1.bf16.msra.mxu0 %v1869
      %1879 = vmatprep.subr.bf16.mxu0 0
      %1880 = vmatpush1.bf16.msra.mxu0 %v1870
      %1881 = vmatprep.subr.bf16.mxu0 0
      %1882 = vmatpush1.bf16.msra.mxu0 0
      %1883 = vmatprep.subr.bf16.mxu0 0
      %1884 = vmatpush1.bf16.msra.mxu0 0
      %1885 = vmatprep.subr.bf16.mxu0 0
      %1886 = vmatpush1.bf16.msra.mxu0 0
      %1887 = vmatprep.subr.bf16.mxu0 0
      %1888 = vmatpush1.bf16.msra.mxu0 0
      %1889 = vmatprep.subr.bf16.mxu0 0
      %1890 = vmatpush1.bf16.msra.mxu0 0
      %1891 = vmatprep.subr.bf16.mxu0 0
      %1892 = vmatpush1.bf16.msra.mxu0 0
      %1893 = vmatprep.subr.bf16.mxu0 0
      %1894 = vmatpush1.bf16.msra.mxu0 0
      %1895 = vmatprep.subr.bf16.mxu0 0
      %1896 = vmatpush1.bf16.msra.mxu0 0
      %1897 = vmatprep.subr.bf16.mxu0 0
      %1898 = vmatpush1.bf16.msra.mxu0 0
      %1899 = vmatprep.subr.bf16.mxu0 0
      %1900 = vmatpush1.bf16.msra.mxu0 0
      %1901 = vmatprep.subr.bf16.mxu0 0
      %1902 = vmatpush1.bf16.msra.mxu0 0
      %1903 = vmatprep.subr.bf16.mxu0 0
      %1904 = vmatpush1.bf16.msra.mxu0 0
      %1905 = vmatprep.subr.bf16.mxu0 0
      %1906 = vmatpush1.bf16.msra.mxu0 0
      %1907 = vmatprep.subr.bf16.mxu0 0
      %1908 = vmatpush1.bf16.msra.mxu0 0
      %1909 = vmatprep.mubr.bf16.mxu0 0
      %1910 = vmatmul.mubr.bf16.gmra.mrb[0].mxu0 %v1875
      %v1911 = vpop.f32.mrb[0].mxu0
      %v1912 = vadd.f32 %v1859, %v1911
      %v1913 = vpop.f32.mrb[0].mxu0
      %v1914 = vpop.f32.mrb[0].mxu0
      %v1915 = vpop.f32.mrb[0].mxu0
      %1916 = vdwg.mxu0
      %1917 = vst [vmem:[%s733] sm:$0xff] %v1912
      %v1918 = vld [vmem:[%s16] sm:$0xf]
      %v1919 = vld [vmem:[%s16 + $0x4] sm:$0xf]
      %v1920 = vld [vmem:[%s16 + $0x8] sm:$0xf]
      %v1921 = vld [vmem:[%s16 + $0xc] sm:$0xf]
      %v1922 = vld [vmem:[%s16 + $0x10] sm:$0xf]
      %v1923 = vld [vmem:[%s16 + $0x14] sm:$0xf]
      %v1924 = vld [vmem:[%s16 + $0x18] sm:$0xf]
      %v1925 = vld [vmem:[%s16 + $0x1c] sm:$0xf]
      %v1926 = vld [vmem:[%s16 + $0x20] sm:$0xf]
      %v1927 = vld [vmem:[%s16 + $0x24] sm:$0xf]
      %v1928 = vld [vmem:[%s16 + $0x28] sm:$0xf]
      %v1929 = vld [vmem:[%s16 + $0x2c] sm:$0xf]
      %v1930 = vld [vmem:[%s16 + $0x30] sm:$0xf]
      %v1931 = vld [vmem:[%s16 + $0x34] sm:$0xf]
      %v1932 = vld [vmem:[%s16 + $0x38] sm:$0xf]
      %v1933 = vld [vmem:[%s16 + $0x3c] sm:$0xf]
      %v1934 = vld [vmem:[%s17] sm:$0x1]
      %v1936 = vlaneseq
      %v1937 = vshrl.u32 %v1936, 7
      %v1938 = vsub.s32 0, %v1937
      %v1939 = vrot.slane %v1934, %v1938
      %v1957 = vunpack.c.l.b16 %v1918
      %v1958 = vunpack.c.l.b16 %v1919
      %v1959 = vunpack.c.l.b16 %v1920
      %v1960 = vunpack.c.l.b16 %v1921
      %v1961 = vunpack.c.l.b16 %v1922
      %v1962 = vunpack.c.l.b16 %v1923
      %v1963 = vunpack.c.l.b16 %v1924
      %v1964 = vunpack.c.l.b16 %v1925
      %v1965 = vunpack.c.l.b16 %v1926
      %v1966 = vunpack.c.l.b16 %v1927
      %v1967 = vunpack.c.l.b16 %v1928
      %v1968 = vunpack.c.l.b16 %v1929
      %v1969 = vunpack.c.l.b16 %v1930
      %v1970 = vunpack.c.l.b16 %v1931
      %v1971 = vunpack.c.l.b16 %v1932
      %v1972 = vunpack.c.l.b16 %v1933
      %v1973 = vpack.c.b16 %v1958, %v1957
      %v1974 = vpack.c.b16 %v1960, %v1959
      %v1975 = vpack.c.b16 %v1962, %v1961
      %v1976 = vpack.c.b16 %v1964, %v1963
      %v1977 = vpack.c.b16 %v1966, %v1965
      %v1978 = vpack.c.b16 %v1968, %v1967
      %v1979 = vpack.c.b16 %v1970, %v1969
      %v1980 = vpack.c.b16 %v1972, %v1971
      %1989 = vmatprep.subr.bf16.mxu0 0
      %1990 = vmatpush1.bf16.msra.mxu0 %v1973
      %1991 = vmatprep.subr.bf16.mxu0 0
      %1992 = vmatpush1.bf16.msra.mxu0 %v1974
      %1993 = vmatprep.subr.bf16.mxu0 0
      %1994 = vmatpush1.bf16.msra.mxu0 %v1975
      %1995 = vmatprep.subr.bf16.mxu0 0
      %1996 = vmatpush1.bf16.msra.mxu0 %v1976
      %1997 = vmatprep.subr.bf16.mxu0 0
      %1998 = vmatpush1.bf16.msra.mxu0 %v1977
      %1999 = vmatprep.subr.bf16.mxu0 0
      %2000 = vmatpush1.bf16.msra.mxu0 %v1978
      %2001 = vmatprep.subr.bf16.mxu0 0
      %2002 = vmatpush1.bf16.msra.mxu0 %v1979
      %2003 = vmatprep.subr.bf16.mxu0 0
      %2004 = vmatpush1.bf16.msra.mxu0 %v1980
      %2005 = vmatprep.subr.bf16.mxu0 0
      %2006 = vmatpush1.bf16.msra.mxu0 0
      %2007 = vmatprep.subr.bf16.mxu0 0
      %2008 = vmatpush1.bf16.msra.mxu0 0
      %2009 = vmatprep.subr.bf16.mxu0 0
      %2010 = vmatpush1.bf16.msra.mxu0 0
      %2011 = vmatprep.subr.bf16.mxu0 0
      %2012 = vmatpush1.bf16.msra.mxu0 0
      %2013 = vmatprep.subr.bf16.mxu0 0
      %2014 = vmatpush1.bf16.msra.mxu0 0
      %2015 = vmatprep.subr.bf16.mxu0 0
      %2016 = vmatpush1.bf16.msra.mxu0 0
      %2017 = vmatprep.subr.bf16.mxu0 0
      %2018 = vmatpush1.bf16.msra.mxu0 0
      %2019 = vmatprep.subr.bf16.mxu0 0
      %2020 = vmatpush1.bf16.msra.mxu0 0
      %2021 = vmatprep.mubr.bf16.mxu0 0
      %2022 = vmatmul.mubr.bf16.gmra.mrb[0].mxu0 %v1680
      %v2023 = vpop.f32.mrb[0].mxu0
      %v2024 = vadd.f32 %v1939, %v2023
      %v2025 = vpop.f32.mrb[0].mxu0
      %v2026 = vpop.f32.mrb[0].mxu0
      %v2027 = vadd.f32 %v1939, %v2026
      %v2028 = vpop.f32.mrb[0].mxu0
      %2029 = vdwg.mxu0
      %v2030 = vmax.f32 %v2024, 0.0
      %v2031 = vmax.f32 %v2027, 0.0
      %v2032 = vpack.c.bf16 %v2031, %v2030
      %v2033 = vld [vmem:[%s18] sm:$0xf]
      %v2034 = vld [vmem:[%s18 + $0x4] sm:$0xf]
      %v2035 = vld [vmem:[%s18 + $0x8] sm:$0xf]
      %v2036 = vld [vmem:[%s18 + $0xc] sm:$0xf]
      %v2037 = vld [vmem:[%s18 + $0x10] sm:$0xf]
      %v2038 = vld [vmem:[%s18 + $0x14] sm:$0xf]
      %v2039 = vld [vmem:[%s18 + $0x18] sm:$0xf]
      %v2040 = vld [vmem:[%s18 + $0x1c] sm:$0xf]
      %v2041 = vld [vmem:[%s19] sm:$0x1]
      %v2043 = vlaneseq
      %v2044 = vshrl.u32 %v2043, 7
      %v2045 = vsub.s32 0, %v2044
      %v2046 = vrot.slane %v2041, %v2045
      %v2056 = vunpack.c.l.b16 %v2033
      %v2057 = vunpack.c.l.b16 %v2034
      %v2058 = vunpack.c.l.b16 %v2035
      %v2059 = vunpack.c.l.b16 %v2036
      %v2060 = vunpack.c.l.b16 %v2037
      %v2061 = vunpack.c.l.b16 %v2038
      %v2062 = vunpack.c.l.b16 %v2039
      %v2063 = vunpack.c.l.b16 %v2040
      %v2064 = vpack.c.b16 %v2057, %v2056
      %v2065 = vpack.c.b16 %v2059, %v2058
      %v2066 = vpack.c.b16 %v2061, %v2060
      %v2067 = vpack.c.b16 %v2063, %v2062
      %v2073 = vsel %vm903, %v2032, 0
      %2075 = vmatprep.subr.bf16.mxu0 0
      %2076 = vmatpush1.bf16.msra.mxu0 %v2064
      %2077 = vmatprep.subr.bf16.mxu0 0
      %2078 = vmatpush1.bf16.msra.mxu0 %v2065
      %2079 = vmatprep.subr.bf16.mxu0 0
      %2080 = vmatpush1.bf16.msra.mxu0 %v2066
      %2081 = vmatprep.subr.bf16.mxu0 0
      %2082 = vmatpush1.bf16.msra.mxu0 %v2067
      %2083 = vmatprep.subr.bf16.mxu0 0
      %2084 = vmatpush1.bf16.msra.mxu0 0
      %2085 = vmatprep.subr.bf16.mxu0 0
      %2086 = vmatpush1.bf16.msra.mxu0 0
      %2087 = vmatprep.subr.bf16.mxu0 0
      %2088 = vmatpush1.bf16.msra.mxu0 0
      %2089 = vmatprep.subr.bf16.mxu0 0
      %2090 = vmatpush1.bf16.msra.mxu0 0
      %2091 = vmatprep.subr.bf16.mxu0 0
      %2092 = vmatpush1.bf16.msra.mxu0 0
      %2093 = vmatprep.subr.bf16.mxu0 0
      %2094 = vmatpush1.bf16.msra.mxu0 0
      %2095 = vmatprep.subr.bf16.mxu0 0
      %2096 = vmatpush1.bf16.msra.mxu0 0
      %2097 = vmatprep.subr.bf16.mxu0 0
      %2098 = vmatpush1.bf16.msra.mxu0 0
      %2099 = vmatprep.subr.bf16.mxu0 0
      %2100 = vmatpush1.bf16.msra.mxu0 0
      %2101 = vmatprep.subr.bf16.mxu0 0
      %2102 = vmatpush1.bf16.msra.mxu0 0
      %2103 = vmatprep.subr.bf16.mxu0 0
      %2104 = vmatpush1.bf16.msra.mxu0 0
      %2105 = vmatprep.subr.bf16.mxu0 0
      %2106 = vmatpush1.bf16.msra.mxu0 0
      %2107 = vmatprep.mubr.bf16.mxu0 0
      %2108 = vmatmul.mubr.bf16.gmra.mrb[0].mxu0 %v2073
      %v2109 = vpop.f32.mrb[0].mxu0
      %v2110 = vadd.f32 %v2046, %v2109
      %v2111 = vpop.f32.mrb[0].mxu0
      %v2112 = vpop.f32.mrb[0].mxu0
      %v2113 = vadd.f32 %v2046, %v2112
      %v2114 = vpop.f32.mrb[0].mxu0
      %2115 = vdwg.mxu0
      %v2116 = vmax.f32 %v2110, 0.0
      %v2117 = vmax.f32 %v2113, 0.0
      %v2118 = vpack.c.bf16 %v2117, %v2116
      %v2119 = vld [vmem:[%s20] sm:$0xf]
      %v2120 = vld [vmem:[%s20 + $0x4] sm:$0xf]
      %v2121 = vld [vmem:[%s20 + $0x8] sm:$0xf]
      %v2122 = vld [vmem:[%s20 + $0xc] sm:$0xf]
      %v2123 = vld [vmem:[%s21] sm:$0x1]
      %v2125 = vlaneseq
      %v2126 = vshrl.u32 %v2125, 7
      %v2127 = vsub.s32 0, %v2126
      %v2128 = vrot.slane %v2123, %v2127
      %v2134 = vunpack.c.l.b16 %v2119
      %v2135 = vunpack.c.l.b16 %v2120
      %v2136 = vunpack.c.l.b16 %v2121
      %v2137 = vunpack.c.l.b16 %v2122
      %v2138 = vpack.c.b16 %v2135, %v2134
      %v2139 = vpack.c.b16 %v2137, %v2136
      %v2143 = vsel %vm1873, %v2118, 0
      %2145 = vmatprep.subr.bf16.mxu0 0
      %2146 = vmatpush1.bf16.msra.mxu0 %v2138
      %2147 = vmatprep.subr.bf16.mxu0 0
      %2148 = vmatpush1.bf16.msra.mxu0 %v2139
      %2149 = vmatprep.subr.bf16.mxu0 0
      %2150 = vmatpush1.bf16.msra.mxu0 0
      %2151 = vmatprep.subr.bf16.mxu0 0
      %2152 = vmatpush1.bf16.msra.mxu0 0
      %2153 = vmatprep.subr.bf16.mxu0 0
      %2154 = vmatpush1.bf16.msra.mxu0 0
      %2155 = vmatprep.subr.bf16.mxu0 0
      %2156 = vmatpush1.bf16.msra.mxu0 0
      %2157 = vmatprep.subr.bf16.mxu0 0
      %2158 = vmatpush1.bf16.msra.mxu0 0
      %2159 = vmatprep.subr.bf16.mxu0 0
      %2160 = vmatpush1.bf16.msra.mxu0 0
      %2161 = vmatprep.subr.bf16.mxu0 0
      %2162 = vmatpush1.bf16.msra.mxu0 0
      %2163 = vmatprep.subr.bf16.mxu0 0
      %2164 = vmatpush1.bf16.msra.mxu0 0
      %2165 = vmatprep.subr.bf16.mxu0 0
      %2166 = vmatpush1.bf16.msra.mxu0 0
      %2167 = vmatprep.subr.bf16.mxu0 0
      %2168 = vmatpush1.bf16.msra.mxu0 0
      %2169 = vmatprep.subr.bf16.mxu0 0
      %2170 = vmatpush1.bf16.msra.mxu0 0
      %2171 = vmatprep.subr.bf16.mxu0 0
      %2172 = vmatpush1.bf16.msra.mxu0 0
      %2173 = vmatprep.subr.bf16.mxu0 0
      %2174 = vmatpush1.bf16.msra.mxu0 0
      %2175 = vmatprep.subr.bf16.mxu0 0
      %2176 = vmatpush1.bf16.msra.mxu0 0
      %2177 = vmatprep.mubr.bf16.mxu0 0
      %2178 = vmatmul.mubr.bf16.gmra.mrb[0].mxu0 %v2143
      %v2179 = vpop.f32.mrb[0].mxu0
      %v2180 = vadd.f32 %v2128, %v2179
      %v2181 = vpop.f32.mrb[0].mxu0
      %v2182 = vpop.f32.mrb[0].mxu0
      %v2183 = vadd.f32 %v2128, %v2182
      %v2184 = vpop.f32.mrb[0].mxu0
      %2185 = vdwg.mxu0
      %2186 = vst [vmem:[%s738] sm:$0xff] %v2180
      %2187 = vst [vmem:[%s738 + $0x8] sm:$0xf] %v2183
      %p2188 = scmp.lt.s32.totalorder %s35, 1
      %s2189 = scalar_select %p2188, %s35, 1
      %s2190 = smul.addr %s2189, 8
      %s2191 = scalar_lea.vmem %s22, %s2190
      %p2192 = scmp.lt.s32.totalorder %s35, 1
      %s2193 = scalar_select %p2192, %s35, 1
      %s2194 = smul.addr %s2193, 2
      %s2195 = smul.addr %s2194, 8
      %s2196 = scalar_lea.vmem %s23, %s2195
      // Predicated region
      $region109: #{gnn_energy_model_forward.1} parent=107 // pred_check
        %p2197 = pneg %p525
      $region110: #{gnn_energy_model_forward.1} parent=107 // pred_check_branch
        %2199 = sbr.rel (%p2197) target = $region112
      $region111: #{gnn_energy_model_forward.1} parent=107 // pred_region
        _
      $region112: #{gnn_energy_model_forward.1} parent=107 // pred_fallthru
        _
      // Predicated region
      $region113: #{gnn_energy_model_forward.1} parent=107 // pred_check
        %p2200 = pneg %p551
      $region114: #{gnn_energy_model_forward.1} parent=107 // pred_check_branch
        %2202 = sbr.rel (%p2200) target = $region116
      $region115: #{gnn_energy_model_forward.1} parent=107 // pred_region
        _
      $region116: #{gnn_energy_model_forward.1} parent=107 // pred_fallthru
        _
    $region108: #{gnn_energy_model_forward.1} parent=5 // pred_fallthru
      _
    %p2203 = scmp.le.s32.totalorder 2, %s30
    // Predicated region
    $region117: #{gnn_energy_model_forward.1} parent=5 // pred_check
      %p2204 = pneg %p2203
    $region118: #{gnn_energy_model_forward.1} parent=5 // pred_check_branch
      %2206 = sbr.rel (%p2204) target = $region120
    $region119: #{gnn_energy_model_forward.1} parent=5 // pred_region
      %s2207 = ssub.s32 %s30, 2
      // Predicated region
      $region121: #{gnn_energy_model_forward.1} parent=119 // pred_check
        %p2208 = pneg %p531
      $region122: #{gnn_energy_model_forward.1} parent=119 // pred_check_branch
        %2210 = sbr.rel (%p2208) target = $region124
      $region123: #{gnn_energy_model_forward.1} parent=119 // pred_region
        %p2211 = scmp.lt.s32.totalorder %s36, 1
        %s2212 = scalar_select %p2211, %s36, 1
        %s2213 = smul.addr %s2212, 8
        %s2214 = scalar_lea.vmem %s22, %s2213
      $region124: #{gnn_energy_model_forward.1} parent=119 // pred_fallthru
        _
      // Predicated region
      $region125: #{gnn_energy_model_forward.1} parent=119 // pred_check
        %p2215 = pneg %p557
      $region126: #{gnn_energy_model_forward.1} parent=119 // pred_check_branch
        %2217 = sbr.rel (%p2215) target = $region128
      $region127: #{gnn_energy_model_forward.1} parent=119 // pred_region
        %p2218 = scmp.lt.s32.totalorder %s36, 1
        %s2219 = scalar_select %p2218, %s36, 1
        %s2220 = smul.addr %s2219, 2
        %s2221 = smul.addr %s2220, 8
        %s2222 = scalar_lea.vmem %s23, %s2221
      $region128: #{gnn_energy_model_forward.1} parent=119 // pred_fallthru
        _
    $region120: #{gnn_energy_model_forward.1} parent=5 // pred_fallthru
      _
  $region6: #{gnn_energy_model_forward.1} parent=0 // loop_footer
    %s34 = sadd.s32 1, %s30
  $region7: #{gnn_energy_model_forward.1} parent=0 // loop_footer_branch
    %29 = sbr.rel target = $region3
  $region8: #{gnn_energy_model_forward.1} parent=0 // loop_exit
    _

</llo_original>
